<compile_context>
chip_gen: v7x
topology: tpu7x:2x2x1
jax: 0.10.0
libtpu: 0.0.40
codegen_flags: <defaults>
</compile_context>

<pallas_src>
import functools

import numpy as np
import jax
import jax.numpy as jnp
from jax.experimental import pallas as pl
from jax.experimental.pallas import tpu as pltpu

_HALO = 8  # sublane-aligned zero halo, >= max conv padding (3 for k=7)


def _resnet_block_kernel(expand, *refs):
    if expand:
        (x_ref, wx_ref, wy_ref, wz_ref, wsc_ref,
         bx_ref, by_ref, bz_ref, bsc_ref, o_ref, buf_ref) = refs
    else:
        (x_ref, wx_ref, wy_ref, wz_ref,
         bx_ref, by_ref, bz_ref, ssc_ref, bsc_ref, o_ref, buf_ref) = refs

    _, L, Cin = x_ref.shape
    _, Cout8, _ = o_ref.shape
    Cpad = buf_ref.shape[1]

    # Zero the halo rows once per grid step.  Channel-padding lanes of the interior
    # rows are zeroed by the full-width stores below (activations carry zeros there).
    zhalo = jnp.zeros((_HALO, Cpad), jnp.bfloat16)
    buf_ref[pl.ds(0, _HALO), :] = zhalo
    buf_ref[pl.ds(_HALO + L, _HALO), :] = zhalo

    def conv(w_ref):
        """'same' conv over the activation currently staged in buf_ref.

        K shifted (L, Cpad) bf16 taps (static sublane slices of the zero-haloed
        scratch) are matmul'd against their (Cpad, Cpad) bf16 weight slab and
        accumulated in f32 -- no im2col buffer is ever materialized.
        """
        K = w_ref.shape[0]
        p = K // 2
        acc = jnp.zeros((L, Cpad), jnp.float32)
        for k in range(K):
            tap = buf_ref[pl.ds(_HALO - p + k, L), :]             # (L, Cpad) bf16
            acc = acc + jnp.dot(tap, w_ref[k],
                                preferred_element_type=jnp.float32)
        return acc

    # ---- stage the input: channel-pad Cin -> Cpad in VMEM, cast to bf16 --------
    if Cin == Cpad:
        buf_ref[pl.ds(_HALO, L), :] = x_ref[0].astype(jnp.bfloat16)
    else:
        buf_ref[pl.ds(_HALO, L), :] = jnp.zeros((L, Cpad), jnp.bfloat16)
        buf_ref[pl.ds(_HALO, L), 0:Cin] = x_ref[0].astype(jnp.bfloat16)
    xp_bf = buf_ref[pl.ds(_HALO, L), :]                           # (L, Cpad) bf16

    # ---- shortcut pre-activation (BN folded into scale/shift) ------------------
    if expand:   # 1x1 conv (BN scale folded into the weight) + shift
        sc = jnp.dot(xp_bf, wsc_ref[...],
                     preferred_element_type=jnp.float32) + bsc_ref[...]
    else:        # bn_shortcut_y only (identity shortcut)
        sc = xp_bf.astype(jnp.float32) * ssc_ref[...] + bsc_ref[...]

    # ---- conv_x -> bn_x -> relu ; conv_y -> bn_y -> relu ; conv_z -> bn_z ------
    h = jnp.maximum(conv(wx_ref) + bx_ref[...], 0.0)
    buf_ref[pl.ds(_HALO, L), :] = h.astype(jnp.bfloat16)
    h = jnp.maximum(conv(wy_ref) + by_ref[...], 0.0)
    buf_ref[pl.ds(_HALO, L), :] = h.astype(jnp.bfloat16)
    h = conv(wz_ref) + bz_ref[...]

    # ---- residual add + relu, emit directly in PyTorch (C, L) layout -----------
    res = jnp.maximum(h + sc, 0.0)                                # (L, Cpad) f32
    res_t = jnp.transpose(res, (1, 0))[:Cout8, :]                 # (Cout8, L)
    o_ref[0] = res_t.astype(o_ref.dtype)


def _round_up(n, m):
    return (n + m - 1) // m * m


def _fold_bn(gamma, beta, mean, var, conv_bias, eps):
    scale = gamma / jnp.sqrt(var + eps)
    shift = beta - mean * scale
    if conv_bias is not None:
        shift = shift + conv_bias * scale
    return scale, shift


def _fold_weight(w, Cpad, scale):
    # (K, Ci, Co): fold BN scale over Co, zero-pad channels, cast to bf16 for the MXU.
    K, Ci, Co = w.shape
    w = w * scale[None, None, :]
    w = jnp.pad(w, ((0, 0), (0, Cpad - Ci), (0, Cpad - Co)))
    return w.astype(jnp.bfloat16)                                 # (K, Cpad, Cpad)


def _pad_vec(v, Cpad):
    return jnp.pad(v, (0, Cpad - v.shape[0]))[None, :].astype(jnp.float32)  # (1, Cpad)


def resnet_block(x_ncl, p, expand, eps=1e-5):
    """x_ncl: (B, Cin, L) like the PyTorch module. Returns (B, Cout, L) float32."""
    B, Cin, L = x_ncl.shape
    Cout = p["wx"].shape[2]
    if not expand:
        # Matches the PyTorch module: the residual add requires Cin == Cout.
        assert Cin == Cout, "non-expanding block requires in_channels == out_channels"
    Cpad = _round_up(max(Cin, Cout), 128)     # lane-dense matmul operands (in VMEM only)
    Cout8 = _round_up(Cout, 8)                # sublane-dense output writeback

    # eval-mode BN -> per-channel (scale, shift); scale rides inside the conv weights.
    sx, bx = _fold_bn(p["gx"], p["betx"], p["mx"], p["vx"], p["bx"], eps)
    sy, by = _fold_bn(p["gy"], p["bety"], p["my"], p["vy"], p["by"], eps)
    sz, bz = _fold_bn(p["gz"], p["betz"], p["mz"], p["vz"], p["bz"], eps)
    ssc, bsc = _fold_bn(p["gsc"], p["betsc"], p["msc"], p["vsc"],
                        p["bsc"] if expand else None, eps)

    wx = _fold_weight(p["wx"], Cpad, sx)      # (7, Cpad, Cpad) bf16
    wy = _fold_weight(p["wy"], Cpad, sy)      # (5, Cpad, Cpad) bf16
    wz = _fold_weight(p["wz"], Cpad, sz)      # (3, Cpad, Cpad) bf16

    # channels-last for the kernel, but NOT channel-padded in HBM.
    x = jnp.transpose(x_ncl, (0, 2, 1)).astype(jnp.float32)       # (B, L, Cin)

    def const_spec(shape):
        return pl.BlockSpec(shape, lambda b: (0,) * len(shape))

    args = [x, wx, wy, wz]
    in_specs = [pl.BlockSpec((1, L, Cin), lambda b: (b, 0, 0)),
                const_spec((7, Cpad, Cpad)),
                const_spec((5, Cpad, Cpad)),
                const_spec((3, Cpad, Cpad))]
    if expand:
        args.append(_fold_weight(p["wsc"], Cpad, ssc)[0])         # (Cpad, Cpad) bf16
        in_specs.append(const_spec((Cpad, Cpad)))

    args += [_pad_vec(bx, Cpad), _pad_vec(by, Cpad), _pad_vec(bz, Cpad)]
    in_specs += [const_spec((1, Cpad)) for _ in range(3)]
    if not expand:
        args.append(_pad_vec(ssc, Cpad))
        in_specs.append(const_spec((1, Cpad)))
    args.append(_pad_vec(bsc, Cpad))
    in_specs.append(const_spec((1, Cpad)))

    n_taps = 7 + 5 + 3 + (1 if expand else 0)
    flops = 2 * B * L * Cpad * Cpad * n_taps
    param_bytes = sum(int(a.size) * a.dtype.itemsize for a in args[1:])
    bytes_accessed = int(x.size) * 4 + B * Cout8 * L * 4 + param_bytes

    out = pl.pallas_call(
        functools.partial(_resnet_block_kernel, expand),
        out_shape=jax.ShapeDtypeStruct((B, Cout8, L), jnp.float32),
        grid_spec=pltpu.PrefetchScalarGridSpec(
            num_scalar_prefetch=0,
            grid=(B,),
            in_specs=in_specs,
            out_specs=pl.BlockSpec((1, Cout8, L), lambda b: (b, 0, 0)),
            scratch_shapes=[pltpu.VMEM((L + 2 * _HALO, Cpad), jnp.bfloat16)],
        ),
        compiler_params=pltpu.CompilerParams(
            dimension_semantics=("parallel",),
            vmem_limit_bytes=32 * 1024 * 1024,
        ),
        cost_estimate=pl.CostEstimate(flops=int(flops), transcendentals=0,
                                      bytes_accessed=int(bytes_accessed)),
    )(*args)

    return out[:, :Cout, :]                                       # (B, Cout, L)


# ---------------- pure-JAX reference (for correctness check) ----------------
def resnet_block_ref(x_ncl, p, expand, eps=1e-5):
    x = jnp.transpose(x_ncl, (0, 2, 1))                           # (B, L, Cin)

    def conv(h, w, b):
        K = w.shape[0]
        pad = K // 2
        L = h.shape[1]
        hp = jnp.pad(h, ((0, 0), (pad, pad), (0, 0)))
        return sum(jnp.einsum("blc,cd->bld", hp[:, k:k + L, :], w[k])
                   for k in range(K)) + b

    def bn(h, g, be, m, v):
        return (h - m) / jnp.sqrt(v + eps) * g + be

    h = jax.nn.relu(bn(conv(x, p["wx"], p["bx"]), p["gx"], p["betx"], p["mx"], p["vx"]))
    h = jax.nn.relu(bn(conv(h, p["wy"], p["by"]), p["gy"], p["bety"], p["my"], p["vy"]))
    h = bn(conv(h, p["wz"], p["bz"]), p["gz"], p["betz"], p["mz"], p["vz"])
    sc = conv(x, p["wsc"], p["bsc"]) if expand else x
    sc = bn(sc, p["gsc"], p["betsc"], p["msc"], p["vsc"])
    out = jax.nn.relu(h + sc)
    return jnp.transpose(out, (0, 2, 1))


if __name__ == "__main__":
    def make_params(key, Cin, Cout):
        ks = iter(jax.random.split(key, 40))
        nxt = lambda: next(ks)
        conv_w = lambda K, ci, co: 0.1 * jax.random.normal(nxt(), (K, ci, co), jnp.float32)
        conv_b = lambda co: 0.1 * jax.random.normal(nxt(), (co,), jnp.float32)

        def bn_params(c):
            gamma = 1.0 + 0.1 * jax.random.normal(nxt(), (c,), jnp.float32)
            beta = 0.1 * jax.random.normal(nxt(), (c,), jnp.float32)
            mean = 0.1 * jax.random.normal(nxt(), (c,), jnp.float32)
            var = jnp.abs(jax.random.normal(nxt(), (c,), jnp.float32)) + 0.5
            return gamma, beta, mean, var

        p = {}
        p["wx"], p["bx"] = conv_w(7, Cin, Cout), conv_b(Cout)
        p["gx"], p["betx"], p["mx"], p["vx"] = bn_params(Cout)
        p["wy"], p["by"] = conv_w(5, Cout, Cout), conv_b(Cout)
        p["gy"], p["bety"], p["my"], p["vy"] = bn_params(Cout)
        p["wz"], p["bz"] = conv_w(3, Cout, Cout), conv_b(Cout)
        p["gz"], p["betz"], p["mz"], p["vz"] = bn_params(Cout)
        if Cin < Cout:
            p["wsc"], p["bsc"] = conv_w(1, Cin, Cout), conv_b(Cout)
        p["gsc"], p["betsc"], p["msc"], p["vsc"] = bn_params(Cout)
        return p

    key = jax.random.PRNGKey(0)
    k1, k2, k3, k4 = jax.random.split(key, 4)

    # bf16 MXU operands -> compare to the f32 reference with a bf16-appropriate tolerance.
    RTOL, ATOL = 2e-2, 3e-2

    # Case 1: expanding block (in_channels < out_channels), like the module spec.
    B, Cin, Cout, L = 2, 4, 8, 16
    p = make_params(k1, Cin, Cout)
    x = jax.random.normal(k2, (B, Cin, L), jnp.float32)
    out = jax.block_until_ready(resnet_block(x, p, expand=True))
    ref = resnet_block_ref(x, p, expand=True)
    assert out.shape == (B, Cout, L)
    np.testing.assert_allclose(np.asarray(out), np.asarray(ref), rtol=RTOL, atol=ATOL)

    # Case 2: identity-shortcut block (in_channels == out_channels).
    B2, C2, L2 = 2, 8, 16
    p2 = make_params(k3, C2, C2)
    x2 = jax.random.normal(k4, (B2, C2, L2), jnp.float32)
    out2 = jax.block_until_ready(resnet_block(x2, p2, expand=False))
    ref2 = resnet_block_ref(x2, p2, expand=False)
    assert out2.shape == (B2, C2, L2)
    np.testing.assert_allclose(np.asarray(out2), np.asarray(ref2), rtol=RTOL, atol=ATOL)

    print("KERNEL_OK")
</pallas_src>

<mosaic_0001>
module attributes {stable_mosaic.version = 11 : i64} {
  func.func @_resnet_block_kernel(%arg0: i32, %arg1: memref<1x16x4xf32, #tpu.memory_space<vmem>>, %arg2: memref<7x128x128xbf16, #tpu.memory_space<vmem>>, %arg3: memref<5x128x128xbf16, #tpu.memory_space<vmem>>, %arg4: memref<3x128x128xbf16, #tpu.memory_space<vmem>>, %arg5: memref<128x128xbf16, #tpu.memory_space<vmem>>, %arg6: memref<1x128xf32, #tpu.memory_space<vmem>>, %arg7: memref<1x128xf32, #tpu.memory_space<vmem>>, %arg8: memref<1x128xf32, #tpu.memory_space<vmem>>, %arg9: memref<1x128xf32, #tpu.memory_space<vmem>>, %arg10: memref<1x8x16xf32, #tpu.memory_space<vmem>>, %arg11: memref<32x128xbf16, #tpu.memory_space<vmem>>) attributes {dimension_semantics = [#tpu.dimension_semantics<parallel>], iteration_bounds = array<i64: 2>, scalar_prefetch = 0 : i64, scratch_operands = 1 : i64, tpu.core_type = #tpu.core_type<tc>, window_params = [{transform_indices = @transform_0, window_bounds = array<i64: 1, 16, 4>}, {pipeline_mode = #tpu.pipeline_mode<synchronous>, transform_indices = @transform_1, window_bounds = array<i64: 7, 128, 128>}, {pipeline_mode = #tpu.pipeline_mode<synchronous>, transform_indices = @transform_2, window_bounds = array<i64: 5, 128, 128>}, {pipeline_mode = #tpu.pipeline_mode<synchronous>, transform_indices = @transform_3, window_bounds = array<i64: 3, 128, 128>}, {pipeline_mode = #tpu.pipeline_mode<synchronous>, transform_indices = @transform_4, window_bounds = array<i64: 128, 128>}, {pipeline_mode = #tpu.pipeline_mode<synchronous>, transform_indices = @transform_5, window_bounds = array<i64: 1, 128>}, {pipeline_mode = #tpu.pipeline_mode<synchronous>, transform_indices = @transform_6, window_bounds = array<i64: 1, 128>}, {pipeline_mode = #tpu.pipeline_mode<synchronous>, transform_indices = @transform_7, window_bounds = array<i64: 1, 128>}, {pipeline_mode = #tpu.pipeline_mode<synchronous>, transform_indices = @transform_8, window_bounds = array<i64: 1, 128>}, {transform_indices = @transform_9, window_bounds = array<i64: 1, 8, 16>}]} {
    %cst = arith.constant 0.000000e+00 : bf16
    %0 = vector.broadcast %cst : bf16 to vector<8x128xbf16>
    %c0 = arith.constant 0 : index
    %c0_0 = arith.constant 0 : index
    %1 = vector.load %arg11[%c0, %c0_0] : memref<32x128xbf16, #tpu.memory_space<vmem>>, vector<8x128xbf16>
    tpu.vector_store %arg11[%c0, %c0_0], %0 {strides = array<i32>} : memref<32x128xbf16, #tpu.memory_space<vmem>>, vector<8x128xbf16>,
    %c24 = arith.constant 24 : index
    %c0_1 = arith.constant 0 : index
    %2 = vector.load %arg11[%c24, %c0_1] : memref<32x128xbf16, #tpu.memory_space<vmem>>, vector<8x128xbf16>
    tpu.vector_store %arg11[%c24, %c0_1], %0 {strides = array<i32>} : memref<32x128xbf16, #tpu.memory_space<vmem>>, vector<8x128xbf16>,
    %cst_2 = arith.constant 0.000000e+00 : bf16
    %3 = vector.broadcast %cst_2 : bf16 to vector<16x128xbf16>
    %c8 = arith.constant 8 : index
    %c0_3 = arith.constant 0 : index
    %4 = vector.load %arg11[%c8, %c0_3] : memref<32x128xbf16, #tpu.memory_space<vmem>>, vector<16x128xbf16>
    tpu.vector_store %arg11[%c8, %c0_3], %3 {strides = array<i32>} : memref<32x128xbf16, #tpu.memory_space<vmem>>, vector<16x128xbf16>,
    %c0_4 = arith.constant 0 : index
    %c0_5 = arith.constant 0 : index
    %c0_6 = arith.constant 0 : index
    %5 = vector.load %arg1[%c0_4, %c0_5, %c0_6] : memref<1x16x4xf32, #tpu.memory_space<vmem>>, vector<1x16x4xf32>
    %6 = vector.shape_cast %5 : vector<1x16x4xf32> to vector<16x4xf32>
    %7 = arith.truncf %6 : vector<16x4xf32> to vector<16x4xbf16>
    %c8_7 = arith.constant 8 : index
    %c0_8 = arith.constant 0 : index
    %8 = vector.load %arg11[%c8_7, %c0_8] : memref<32x128xbf16, #tpu.memory_space<vmem>>, vector<16x4xbf16>
    tpu.vector_store %arg11[%c8_7, %c0_8], %7 {strides = array<i32>} : memref<32x128xbf16, #tpu.memory_space<vmem>>, vector<16x4xbf16>,
    %c8_9 = arith.constant 8 : index
    %c0_10 = arith.constant 0 : index
    %9 = vector.load %arg11[%c8_9, %c0_10] : memref<32x128xbf16, #tpu.memory_space<vmem>>, vector<16x128xbf16>
    %c0_11 = arith.constant 0 : index
    %c0_12 = arith.constant 0 : index
    %10 = vector.load %arg5[%c0_11, %c0_12] : memref<128x128xbf16, #tpu.memory_space<vmem>>, vector<128x128xbf16>
    %cst_13 = arith.constant dense<0.000000e+00> : vector<16x128xf32>
    %11 = tpu.matmul %9, %10, %cst_13 {dimension_numbers = #tpu.dot_dimension_numbers<[1], [0], [0], [1], [0, 0, 1, 1], [], []>} : vector<16x128xbf16>, vector<128x128xbf16>, vector<16x128xf32> -> vector<16x128xf32>
    %c0_14 = arith.constant 0 : index
    %c0_15 = arith.constant 0 : index
    %12 = vector.load %arg9[%c0_14, %c0_15] : memref<1x128xf32, #tpu.memory_space<vmem>>, vector<1x128xf32>
    %13 = vector.broadcast %12 : vector<1x128xf32> to vector<16x128xf32>
    %14 = arith.addf %11, %13 : vector<16x128xf32>
    %cst_16 = arith.constant 0.000000e+00 : f32
    %15 = vector.broadcast %cst_16 : f32 to vector<16x128xf32>
    %c5 = arith.constant 5 : index
    %c0_17 = arith.constant 0 : index
    %16 = vector.load %arg11[%c5, %c0_17] : memref<32x128xbf16, #tpu.memory_space<vmem>>, vector<16x128xbf16>
    %c0_18 = arith.constant 0 : index
    %c0_19 = arith.constant 0 : index
    %c0_20 = arith.constant 0 : index
    %17 = vector.load %arg2[%c0_18, %c0_19, %c0_20] : memref<7x128x128xbf16, #tpu.memory_space<vmem>>, vector<1x128x128xbf16>
    %18 = vector.shape_cast %17 : vector<1x128x128xbf16> to vector<128x128xbf16>
    %cst_21 = arith.constant dense<0.000000e+00> : vector<16x128xf32>
    %19 = tpu.matmul %16, %18, %cst_21 {dimension_numbers = #tpu.dot_dimension_numbers<[1], [0], [0], [1], [0, 0, 1, 1], [], []>} : vector<16x128xbf16>, vector<128x128xbf16>, vector<16x128xf32> -> vector<16x128xf32>
    %20 = arith.addf %15, %19 : vector<16x128xf32>
    %c6 = arith.constant 6 : index
    %c0_22 = arith.constant 0 : index
    %21 = vector.load %arg11[%c6, %c0_22] : memref<32x128xbf16, #tpu.memory_space<vmem>>, vector<16x128xbf16>
    %c1 = arith.constant 1 : index
    %c0_23 = arith.constant 0 : index
    %c0_24 = arith.constant 0 : index
    %22 = vector.load %arg2[%c1, %c0_23, %c0_24] : memref<7x128x128xbf16, #tpu.memory_space<vmem>>, vector<1x128x128xbf16>
    %23 = vector.shape_cast %22 : vector<1x128x128xbf16> to vector<128x128xbf16>
    %cst_25 = arith.constant dense<0.000000e+00> : vector<16x128xf32>
    %24 = tpu.matmul %21, %23, %cst_25 {dimension_numbers = #tpu.dot_dimension_numbers<[1], [0], [0], [1], [0, 0, 1, 1], [], []>} : vector<16x128xbf16>, vector<128x128xbf16>, vector<16x128xf32> -> vector<16x128xf32>
    %25 = arith.addf %20, %24 : vector<16x128xf32>
    %c7 = arith.constant 7 : index
    %c0_26 = arith.constant 0 : index
    %26 = vector.load %arg11[%c7, %c0_26] : memref<32x128xbf16, #tpu.memory_space<vmem>>, vector<16x128xbf16>
    %c2 = arith.constant 2 : index
    %c0_27 = arith.constant 0 : index
    %c0_28 = arith.constant 0 : index
    %27 = vector.load %arg2[%c2, %c0_27, %c0_28] : memref<7x128x128xbf16, #tpu.memory_space<vmem>>, vector<1x128x128xbf16>
    %28 = vector.shape_cast %27 : vector<1x128x128xbf16> to vector<128x128xbf16>
    %cst_29 = arith.constant dense<0.000000e+00> : vector<16x128xf32>
    %29 = tpu.matmul %26, %28, %cst_29 {dimension_numbers = #tpu.dot_dimension_numbers<[1], [0], [0], [1], [0, 0, 1, 1], [], []>} : vector<16x128xbf16>, vector<128x128xbf16>, vector<16x128xf32> -> vector<16x128xf32>
    %30 = arith.addf %25, %29 : vector<16x128xf32>
    %c8_30 = arith.constant 8 : index
    %c0_31 = arith.constant 0 : index
    %31 = vector.load %arg11[%c8_30, %c0_31] : memref<32x128xbf16, #tpu.memory_space<vmem>>, vector<16x128xbf16>
    %c3 = arith.constant 3 : index
    %c0_32 = arith.constant 0 : index
    %c0_33 = arith.constant 0 : index
    %32 = vector.load %arg2[%c3, %c0_32, %c0_33] : memref<7x128x128xbf16, #tpu.memory_space<vmem>>, vector<1x128x128xbf16>
    %33 = vector.shape_cast %32 : vector<1x128x128xbf16> to vector<128x128xbf16>
    %cst_34 = arith.constant dense<0.000000e+00> : vector<16x128xf32>
    %34 = tpu.matmul %31, %33, %cst_34 {dimension_numbers = #tpu.dot_dimension_numbers<[1], [0], [0], [1], [0, 0, 1, 1], [], []>} : vector<16x128xbf16>, vector<128x128xbf16>, vector<16x128xf32> -> vector<16x128xf32>
    %35 = arith.addf %30, %34 : vector<16x128xf32>
    %c9 = arith.constant 9 : index
    %c0_35 = arith.constant 0 : index
    %36 = vector.load %arg11[%c9, %c0_35] : memref<32x128xbf16, #tpu.memory_space<vmem>>, vector<16x128xbf16>
    %c4 = arith.constant 4 : index
    %c0_36 = arith.constant 0 : index
    %c0_37 = arith.constant 0 : index
    %37 = vector.load %arg2[%c4, %c0_36, %c0_37] : memref<7x128x128xbf16, #tpu.memory_space<vmem>>, vector<1x128x128xbf16>
    %38 = vector.shape_cast %37 : vector<1x128x128xbf16> to vector<128x128xbf16>
    %cst_38 = arith.constant dense<0.000000e+00> : vector<16x128xf32>
    %39 = tpu.matmul %36, %38, %cst_38 {dimension_numbers = #tpu.dot_dimension_numbers<[1], [0], [0], [1], [0, 0, 1, 1], [], []>} : vector<16x128xbf16>, vector<128x128xbf16>, vector<16x128xf32> -> vector<16x128xf32>
    %40 = arith.addf %35, %39 : vector<16x128xf32>
    %c10 = arith.constant 10 : index
    %c0_39 = arith.constant 0 : index
    %41 = vector.load %arg11[%c10, %c0_39] : memref<32x128xbf16, #tpu.memory_space<vmem>>, vector<16x128xbf16>
    %c5_40 = arith.constant 5 : index
    %c0_41 = arith.constant 0 : index
    %c0_42 = arith.constant 0 : index
    %42 = vector.load %arg2[%c5_40, %c0_41, %c0_42] : memref<7x128x128xbf16, #tpu.memory_space<vmem>>, vector<1x128x128xbf16>
    %43 = vector.shape_cast %42 : vector<1x128x128xbf16> to vector<128x128xbf16>
    %cst_43 = arith.constant dense<0.000000e+00> : vector<16x128xf32>
    %44 = tpu.matmul %41, %43, %cst_43 {dimension_numbers = #tpu.dot_dimension_numbers<[1], [0], [0], [1], [0, 0, 1, 1], [], []>} : vector<16x128xbf16>, vector<128x128xbf16>, vector<16x128xf32> -> vector<16x128xf32>
    %45 = arith.addf %40, %44 : vector<16x128xf32>
    %c11 = arith.constant 11 : index
    %c0_44 = arith.constant 0 : index
    %46 = vector.load %arg11[%c11, %c0_44] : memref<32x128xbf16, #tpu.memory_space<vmem>>, vector<16x128xbf16>
    %c6_45 = arith.constant 6 : index
    %c0_46 = arith.constant 0 : index
    %c0_47 = arith.constant 0 : index
    %47 = vector.load %arg2[%c6_45, %c0_46, %c0_47] : memref<7x128x128xbf16, #tpu.memory_space<vmem>>, vector<1x128x128xbf16>
    %48 = vector.shape_cast %47 : vector<1x128x128xbf16> to vector<128x128xbf16>
    %cst_48 = arith.constant dense<0.000000e+00> : vector<16x128xf32>
    %49 = tpu.matmul %46, %48, %cst_48 {dimension_numbers = #tpu.dot_dimension_numbers<[1], [0], [0], [1], [0, 0, 1, 1], [], []>} : vector<16x128xbf16>, vector<128x128xbf16>, vector<16x128xf32> -> vector<16x128xf32>
    %50 = arith.addf %45, %49 : vector<16x128xf32>
    %c0_49 = arith.constant 0 : index
    %c0_50 = arith.constant 0 : index
    %51 = vector.load %arg6[%c0_49, %c0_50] : memref<1x128xf32, #tpu.memory_space<vmem>>, vector<1x128xf32>
    %52 = vector.broadcast %51 : vector<1x128xf32> to vector<16x128xf32>
    %53 = arith.addf %50, %52 : vector<16x128xf32>
    %cst_51 = arith.constant 0.000000e+00 : f32
    %54 = vector.broadcast %cst_51 : f32 to vector<16x128xf32>
    %55 = arith.maximumf %53, %54 : vector<16x128xf32>
    %56 = arith.truncf %55 : vector<16x128xf32> to vector<16x128xbf16>
    %c8_52 = arith.constant 8 : index
    %c0_53 = arith.constant 0 : index
    %57 = vector.load %arg11[%c8_52, %c0_53] : memref<32x128xbf16, #tpu.memory_space<vmem>>, vector<16x128xbf16>
    tpu.vector_store %arg11[%c8_52, %c0_53], %56 {strides = array<i32>} : memref<32x128xbf16, #tpu.memory_space<vmem>>, vector<16x128xbf16>,
    %cst_54 = arith.constant 0.000000e+00 : f32
    %58 = vector.broadcast %cst_54 : f32 to vector<16x128xf32>
    %c6_55 = arith.constant 6 : index
    %c0_56 = arith.constant 0 : index
    %59 = vector.load %arg11[%c6_55, %c0_56] : memref<32x128xbf16, #tpu.memory_space<vmem>>, vector<16x128xbf16>
    %c0_57 = arith.constant 0 : index
    %c0_58 = arith.constant 0 : index
    %c0_59 = arith.constant 0 : index
    %60 = vector.load %arg3[%c0_57, %c0_58, %c0_59] : memref<5x128x128xbf16, #tpu.memory_space<vmem>>, vector<1x128x128xbf16>
    %61 = vector.shape_cast %60 : vector<1x128x128xbf16> to vector<128x128xbf16>
    %cst_60 = arith.constant dense<0.000000e+00> : vector<16x128xf32>
    %62 = tpu.matmul %59, %61, %cst_60 {dimension_numbers = #tpu.dot_dimension_numbers<[1], [0], [0], [1], [0, 0, 1, 1], [], []>} : vector<16x128xbf16>, vector<128x128xbf16>, vector<16x128xf32> -> vector<16x128xf32>
    %63 = arith.addf %58, %62 : vector<16x128xf32>
    %c7_61 = arith.constant 7 : index
    %c0_62 = arith.constant 0 : index
    %64 = vector.load %arg11[%c7_61, %c0_62] : memref<32x128xbf16, #tpu.memory_space<vmem>>, vector<16x128xbf16>
    %c1_63 = arith.constant 1 : index
    %c0_64 = arith.constant 0 : index
    %c0_65 = arith.constant 0 : index
    %65 = vector.load %arg3[%c1_63, %c0_64, %c0_65] : memref<5x128x128xbf16, #tpu.memory_space<vmem>>, vector<1x128x128xbf16>
    %66 = vector.shape_cast %65 : vector<1x128x128xbf16> to vector<128x128xbf16>
    %cst_66 = arith.constant dense<0.000000e+00> : vector<16x128xf32>
    %67 = tpu.matmul %64, %66, %cst_66 {dimension_numbers = #tpu.dot_dimension_numbers<[1], [0], [0], [1], [0, 0, 1, 1], [], []>} : vector<16x128xbf16>, vector<128x128xbf16>, vector<16x128xf32> -> vector<16x128xf32>
    %68 = arith.addf %63, %67 : vector<16x128xf32>
    %c8_67 = arith.constant 8 : index
    %c0_68 = arith.constant 0 : index
    %69 = vector.load %arg11[%c8_67, %c0_68] : memref<32x128xbf16, #tpu.memory_space<vmem>>, vector<16x128xbf16>
    %c2_69 = arith.constant 2 : index
    %c0_70 = arith.constant 0 : index
    %c0_71 = arith.constant 0 : index
    %70 = vector.load %arg3[%c2_69, %c0_70, %c0_71] : memref<5x128x128xbf16, #tpu.memory_space<vmem>>, vector<1x128x128xbf16>
    %71 = vector.shape_cast %70 : vector<1x128x128xbf16> to vector<128x128xbf16>
    %cst_72 = arith.constant dense<0.000000e+00> : vector<16x128xf32>
    %72 = tpu.matmul %69, %71, %cst_72 {dimension_numbers = #tpu.dot_dimension_numbers<[1], [0], [0], [1], [0, 0, 1, 1], [], []>} : vector<16x128xbf16>, vector<128x128xbf16>, vector<16x128xf32> -> vector<16x128xf32>
    %73 = arith.addf %68, %72 : vector<16x128xf32>
    %c9_73 = arith.constant 9 : index
    %c0_74 = arith.constant 0 : index
    %74 = vector.load %arg11[%c9_73, %c0_74] : memref<32x128xbf16, #tpu.memory_space<vmem>>, vector<16x128xbf16>
    %c3_75 = arith.constant 3 : index
    %c0_76 = arith.constant 0 : index
    %c0_77 = arith.constant 0 : index
    %75 = vector.load %arg3[%c3_75, %c0_76, %c0_77] : memref<5x128x128xbf16, #tpu.memory_space<vmem>>, vector<1x128x128xbf16>
    %76 = vector.shape_cast %75 : vector<1x128x128xbf16> to vector<128x128xbf16>
    %cst_78 = arith.constant dense<0.000000e+00> : vector<16x128xf32>
    %77 = tpu.matmul %74, %76, %cst_78 {dimension_numbers = #tpu.dot_dimension_numbers<[1], [0], [0], [1], [0, 0, 1, 1], [], []>} : vector<16x128xbf16>, vector<128x128xbf16>, vector<16x128xf32> -> vector<16x128xf32>
    %78 = arith.addf %73, %77 : vector<16x128xf32>
    %c10_79 = arith.constant 10 : index
    %c0_80 = arith.constant 0 : index
    %79 = vector.load %arg11[%c10_79, %c0_80] : memref<32x128xbf16, #tpu.memory_space<vmem>>, vector<16x128xbf16>
    %c4_81 = arith.constant 4 : index
    %c0_82 = arith.constant 0 : index
    %c0_83 = arith.constant 0 : index
    %80 = vector.load %arg3[%c4_81, %c0_82, %c0_83] : memref<5x128x128xbf16, #tpu.memory_space<vmem>>, vector<1x128x128xbf16>
    %81 = vector.shape_cast %80 : vector<1x128x128xbf16> to vector<128x128xbf16>
    %cst_84 = arith.constant dense<0.000000e+00> : vector<16x128xf32>
    %82 = tpu.matmul %79, %81, %cst_84 {dimension_numbers = #tpu.dot_dimension_numbers<[1], [0], [0], [1], [0, 0, 1, 1], [], []>} : vector<16x128xbf16>, vector<128x128xbf16>, vector<16x128xf32> -> vector<16x128xf32>
    %83 = arith.addf %78, %82 : vector<16x128xf32>
    %c0_85 = arith.constant 0 : index
    %c0_86 = arith.constant 0 : index
    %84 = vector.load %arg7[%c0_85, %c0_86] : memref<1x128xf32, #tpu.memory_space<vmem>>, vector<1x128xf32>
    %85 = vector.broadcast %84 : vector<1x128xf32> to vector<16x128xf32>
    %86 = arith.addf %83, %85 : vector<16x128xf32>
    %cst_87 = arith.constant 0.000000e+00 : f32
    %87 = vector.broadcast %cst_87 : f32 to vector<16x128xf32>
    %88 = arith.maximumf %86, %87 : vector<16x128xf32>
    %89 = arith.truncf %88 : vector<16x128xf32> to vector<16x128xbf16>
    %c8_88 = arith.constant 8 : index
    %c0_89 = arith.constant 0 : index
    %90 = vector.load %arg11[%c8_88, %c0_89] : memref<32x128xbf16, #tpu.memory_space<vmem>>, vector<16x128xbf16>
    tpu.vector_store %arg11[%c8_88, %c0_89], %89 {strides = array<i32>} : memref<32x128xbf16, #tpu.memory_space<vmem>>, vector<16x128xbf16>,
    %cst_90 = arith.constant 0.000000e+00 : f32
    %91 = vector.broadcast %cst_90 : f32 to vector<16x128xf32>
    %c7_91 = arith.constant 7 : index
    %c0_92 = arith.constant 0 : index
    %92 = vector.load %arg11[%c7_91, %c0_92] : memref<32x128xbf16, #tpu.memory_space<vmem>>, vector<16x128xbf16>
    %c0_93 = arith.constant 0 : index
    %c0_94 = arith.constant 0 : index
    %c0_95 = arith.constant 0 : index
    %93 = vector.load %arg4[%c0_93, %c0_94, %c0_95] : memref<3x128x128xbf16, #tpu.memory_space<vmem>>, vector<1x128x128xbf16>
    %94 = vector.shape_cast %93 : vector<1x128x128xbf16> to vector<128x128xbf16>
    %cst_96 = arith.constant dense<0.000000e+00> : vector<16x128xf32>
    %95 = tpu.matmul %92, %94, %cst_96 {dimension_numbers = #tpu.dot_dimension_numbers<[1], [0], [0], [1], [0, 0, 1, 1], [], []>} : vector<16x128xbf16>, vector<128x128xbf16>, vector<16x128xf32> -> vector<16x128xf32>
    %96 = arith.addf %91, %95 : vector<16x128xf32>
    %c8_97 = arith.constant 8 : index
    %c0_98 = arith.constant 0 : index
    %97 = vector.load %arg11[%c8_97, %c0_98] : memref<32x128xbf16, #tpu.memory_space<vmem>>, vector<16x128xbf16>
    %c1_99 = arith.constant 1 : index
    %c0_100 = arith.constant 0 : index
    %c0_101 = arith.constant 0 : index
    %98 = vector.load %arg4[%c1_99, %c0_100, %c0_101] : memref<3x128x128xbf16, #tpu.memory_space<vmem>>, vector<1x128x128xbf16>
    %99 = vector.shape_cast %98 : vector<1x128x128xbf16> to vector<128x128xbf16>
    %cst_102 = arith.constant dense<0.000000e+00> : vector<16x128xf32>
    %100 = tpu.matmul %97, %99, %cst_102 {dimension_numbers = #tpu.dot_dimension_numbers<[1], [0], [0], [1], [0, 0, 1, 1], [], []>} : vector<16x128xbf16>, vector<128x128xbf16>, vector<16x128xf32> -> vector<16x128xf32>
    %101 = arith.addf %96, %100 : vector<16x128xf32>
    %c9_103 = arith.constant 9 : index
    %c0_104 = arith.constant 0 : index
    %102 = vector.load %arg11[%c9_103, %c0_104] : memref<32x128xbf16, #tpu.memory_space<vmem>>, vector<16x128xbf16>
    %c2_105 = arith.constant 2 : index
    %c0_106 = arith.constant 0 : index
    %c0_107 = arith.constant 0 : index
    %103 = vector.load %arg4[%c2_105, %c0_106, %c0_107] : memref<3x128x128xbf16, #tpu.memory_space<vmem>>, vector<1x128x128xbf16>
    %104 = vector.shape_cast %103 : vector<1x128x128xbf16> to vector<128x128xbf16>
    %cst_108 = arith.constant dense<0.000000e+00> : vector<16x128xf32>
    %105 = tpu.matmul %102, %104, %cst_108 {dimension_numbers = #tpu.dot_dimension_numbers<[1], [0], [0], [1], [0, 0, 1, 1], [], []>} : vector<16x128xbf16>, vector<128x128xbf16>, vector<16x128xf32> -> vector<16x128xf32>
    %106 = arith.addf %101, %105 : vector<16x128xf32>
    %c0_109 = arith.constant 0 : index
    %c0_110 = arith.constant 0 : index
    %107 = vector.load %arg8[%c0_109, %c0_110] : memref<1x128xf32, #tpu.memory_space<vmem>>, vector<1x128xf32>
    %108 = vector.broadcast %107 : vector<1x128xf32> to vector<16x128xf32>
    %109 = arith.addf %106, %108 : vector<16x128xf32>
    %110 = arith.addf %109, %14 : vector<16x128xf32>
    %cst_111 = arith.constant 0.000000e+00 : f32
    %111 = vector.broadcast %cst_111 : f32 to vector<16x128xf32>
    %112 = arith.maximumf %110, %111 : vector<16x128xf32>
    %113 = tpu.transpose %112, [1, 0] : vector<16x128xf32> -> vector<128x16xf32>
    %114 = vector.extract_strided_slice %113 {offsets = [0, 0], sizes = [8, 16], strides = [1, 1]} : vector<128x16xf32> to vector<8x16xf32>
    %c0_112 = arith.constant 0 : index
    %c0_113 = arith.constant 0 : index
    %c0_114 = arith.constant 0 : index
    %115 = vector.load %arg10[%c0_112, %c0_113, %c0_114] : memref<1x8x16xf32, #tpu.memory_space<vmem>>, vector<1x8x16xf32>
    %116 = vector.shape_cast %115 : vector<1x8x16xf32> to vector<8x16xf32>
    %117 = vector.shape_cast %114 : vector<8x16xf32> to vector<1x8x16xf32>
    tpu.vector_store %arg10[%c0_112, %c0_113, %c0_114], %117 {strides = array<i32>} : memref<1x8x16xf32, #tpu.memory_space<vmem>>, vector<1x8x16xf32>,
    return
  }
  func.func @transform_0(%arg0: i32) -> (i32, i32, i32) {
    %c0_i32 = arith.constant 0 : i32
    %c0_i32_0 = arith.constant 0 : i32
    %c0_i32_1 = arith.constant 0 : i32
    return %arg0, %c0_i32, %c0_i32_0 : i32, i32, i32
  }
  func.func @transform_1(%arg0: i32) -> (i32, i32, i32) {
    %c0_i32 = arith.constant 0 : i32
    %c0_i32_0 = arith.constant 0 : i32
    %c0_i32_1 = arith.constant 0 : i32
    %c0_i32_2 = arith.constant 0 : i32
    return %c0_i32, %c0_i32_0, %c0_i32_1 : i32, i32, i32
  }
  func.func @transform_2(%arg0: i32) -> (i32, i32, i32) {
    %c0_i32 = arith.constant 0 : i32
    %c0_i32_0 = arith.constant 0 : i32
    %c0_i32_1 = arith.constant 0 : i32
    %c0_i32_2 = arith.constant 0 : i32
    return %c0_i32, %c0_i32_0, %c0_i32_1 : i32, i32, i32
  }
  func.func @transform_3(%arg0: i32) -> (i32, i32, i32) {
    %c0_i32 = arith.constant 0 : i32
    %c0_i32_0 = arith.constant 0 : i32
    %c0_i32_1 = arith.constant 0 : i32
    %c0_i32_2 = arith.constant 0 : i32
    return %c0_i32, %c0_i32_0, %c0_i32_1 : i32, i32, i32
  }
  func.func @transform_4(%arg0: i32) -> (i32, i32) {
    %c0_i32 = arith.constant 0 : i32
    %c0_i32_0 = arith.constant 0 : i32
    %c0_i32_1 = arith.constant 0 : i32
    return %c0_i32, %c0_i32_0 : i32, i32
  }
  func.func @transform_5(%arg0: i32) -> (i32, i32) {
    %c0_i32 = arith.constant 0 : i32
    %c0_i32_0 = arith.constant 0 : i32
    %c0_i32_1 = arith.constant 0 : i32
    return %c0_i32, %c0_i32_0 : i32, i32
  }
  func.func @transform_6(%arg0: i32) -> (i32, i32) {
    %c0_i32 = arith.constant 0 : i32
    %c0_i32_0 = arith.constant 0 : i32
    %c0_i32_1 = arith.constant 0 : i32
    return %c0_i32, %c0_i32_0 : i32, i32
  }
  func.func @transform_7(%arg0: i32) -> (i32, i32) {
    %c0_i32 = arith.constant 0 : i32
    %c0_i32_0 = arith.constant 0 : i32
    %c0_i32_1 = arith.constant 0 : i32
    return %c0_i32, %c0_i32_0 : i32, i32
  }
  func.func @transform_8(%arg0: i32) -> (i32, i32) {
    %c0_i32 = arith.constant 0 : i32
    %c0_i32_0 = arith.constant 0 : i32
    %c0_i32_1 = arith.constant 0 : i32
    return %c0_i32, %c0_i32_0 : i32, i32
  }
  func.func @transform_9(%arg0: i32) -> (i32, i32, i32) {
    %c0_i32 = arith.constant 0 : i32
    %c0_i32_0 = arith.constant 0 : i32
    %c0_i32_1 = arith.constant 0 : i32
    return %arg0, %c0_i32, %c0_i32_0 : i32, i32, i32
  }
}

</mosaic_0001>

<llo_original>
// kernel: tpu_custom_call.1
$region0: #{tpu_custom_call.1}
  #allocation0 [shape = 'u32[]', space=smem, size = 0x4, offset = 0x4, fixed_abs, tag = 'smem constant byte address 0x4 - core index']
  #allocation1 [shape = 'u32[144,128]{1,0:T(1,128)}', space=vmem, size = 0x12000, scoped, tag = 'internal scratch']
  #allocation2 [shape = 'bf16[32,128]{1,0:T(16,128)(2,1)}', space=vmem, size = 0x2000, scoped, tag = 'scratch operand']
  %s0 = inlined_call_operand.vmem [shape: f32[2,16,4], index: 0, kind: input, shape index: {}]
  %s1 = inlined_call_operand.hbm [shape: bf16[7,128,128], index: 1, kind: input, shape index: {}]
  %s2 = inlined_call_operand.hbm [shape: bf16[5,128,128], index: 2, kind: input, shape index: {}]
  %s3 = inlined_call_operand.hbm [shape: bf16[3,128,128], index: 3, kind: input, shape index: {}]
  %s4 = inlined_call_operand.hbm [shape: bf16[128,128], index: 4, kind: input, shape index: {}]
  %s5 = inlined_call_operand.vmem [shape: f32[1,128], index: 5, kind: input, shape index: {}]
  %s6 = inlined_call_operand.vmem [shape: f32[1,128], index: 6, kind: input, shape index: {}]
  %s7 = inlined_call_operand.vmem [shape: f32[1,128], index: 7, kind: input, shape index: {}]
  %s8 = inlined_call_operand.vmem [shape: f32[1,128], index: 8, kind: input, shape index: {}]
  %s9 = inlined_call_operand.hbm [shape: f32[2,8,16], index: 9, kind: output, shape index: {}]
  %s10 = sld [smem:[#allocation0]]
  $region85: #{tpu_custom_call.1} parent=0
    _
  %s12 = ssub.s32 1, %s10
  %s13 = scalar_select 0, %s12, %s10
  $region1: #{tpu_custom_call.1} parent=0
    #allocation3 [shape = 'u8[229376]{0}', space=vmem, size = 0x38000, scoped, tag = 'input window, operand 1, single buffered']
    #allocation4 [shape = 's32[2]{0}', space=sflag, size = 0x8, scoped, tag = 'scoped memory for tpu_custom_call.1']
    #allocation5 [shape = 's32[2]{0}', space=sflag, size = 0x8, scoped, tag = 'scoped memory for tpu_custom_call.1']
    #allocation6 [shape = 'u8[163840]{0}', space=vmem, size = 0x28000, scoped, tag = 'input window, operand 2, single buffered']
    #allocation7 [shape = 's32[1]{0}', space=sflag, size = 0x4, scoped, tag = 'scoped memory for tpu_custom_call.1']
    #allocation8 [shape = 'u8[98304]{0}', space=vmem, size = 0x18000, scoped, tag = 'input window, operand 3, single buffered']
    #allocation9 [shape = 'u8[32768]{0}', space=vmem, size = 0x8000, scoped, tag = 'input window, operand 4, single buffered']
    #allocation10 [shape = 's32[1]{0}', space=sflag, size = 0x4, scoped, tag = 'scoped memory for tpu_custom_call.1']
    #allocation11 [shape = 'u8[8192]{0}', space=vmem, size = 0x2000, scoped, tag = 'output window, operand 0']
    %14 = vsyncpa [#allocation4], 0
    %15 = vsyncpa [#allocation7], 0
    %16 = vsyncpa [#allocation10], 0
    %17 = vsyncpa [#allocation5], 0
    %s18 = scalar_lea.sflag [#allocation5], 1
    %19 = vsyncpa %s18, 0
    loop: start=0, step=1, limit=4
    $region2: #{tpu_custom_call.1} parent=1 // loop_pre_header
      _
    $region3: #{tpu_custom_call.1} parent=1 // loop_header
      %s21 = sphi 0, %s25
      %p22 = scmp.ge.s32.totalorder %s21, 4
      %s31 = sphi 0, %s33
      %s34 = sphi 0, %s31
      %s35 = sphi 0, %s34
      %s51 = sphi 0, %s35
      %s55 = sphi 0, %s55
      %s57 = sphi 0, %s55
      %s58 = sphi 0, %s57
      %s72 = sphi 0, %s58
      %s76 = sphi 0, %s76
      %s78 = sphi 0, %s76
      %s79 = sphi 0, %s78
      %s93 = sphi 0, %s79
      %s97 = sphi 0, %s97
      %s99 = sphi 0, %s97
      %s100 = sphi 0, %s99
      %s114 = sphi 0, %s100
      %s118 = sphi 0, %s118
      %s120 = sphi 0, %s118
      %s121 = sphi 0, %s120
      %s135 = sphi 0, %s121
      %s139 = sphi 0, %s139
      %s141 = sphi 0, %s139
      %s142 = sphi 0, %s141
      %s156 = sphi 0, %s142
      %s160 = sphi 0, %s160
      %s162 = sphi 0, %s160
      %s163 = sphi 0, %s162
      %s177 = sphi 0, %s163
      %s181 = sphi 0, %s181
      %s183 = sphi 0, %s181
      %s184 = sphi 0, %s183
      %s198 = sphi 0, %s184
      %s202 = sphi 0, %s202
      %s204 = sphi 0, %s202
      %s205 = sphi 0, %s204
      %s219 = sphi 0, %s205
      %s225 = sphi 0, %s227
      %s228 = sphi 0, %s225
      %s229 = sphi 0, %s228
      %s245 = sphi 0, %s229
    $region4: #{tpu_custom_call.1} parent=1 // loop_header_branch
      %24 = sbr.rel (%p22) target = $region8
    $region5: #{tpu_custom_call.1} parent=1 // loop_body
      %s26 = ssub.s32 %s21, 1
      %s27 = ssub.s32 %s21, 2
      %s28 = sadd.s32 %s21, 1
      %s29 = ssub.s32 %s21, %s28
      %p30 = scmp.eq.s32.totalorder %s29, 0
      %s32 = sadd.s32 %s31, 1
      %s33 = scalar_select %p30, %s31, %s32
      %p36 = pneg %p30
      %p37 = scmp.eq.s32.totalorder %s21, 1
      %p38 = por %p36, %p37
      %p39 = scmp.ne.s32.totalorder %s31, %s34
      %p40 = scmp.eq.s32.totalorder %s21, 0
      %p41 = por %p39, %p40
      %p42 = scmp.ne.s32.totalorder %s31, %s34
      %p43 = scmp.eq.s32.totalorder %s26, 1
      %p44 = por %p42, %p43
      %p45 = scmp.ne.s32.totalorder %s34, %s35
      %p46 = scmp.eq.s32.totalorder %s26, 0
      %p47 = por %p45, %p46
      %p48 = scmp.ne.s32.totalorder %s34, %s35
      %p49 = scmp.eq.s32.totalorder %s27, 1
      %p50 = por %p48, %p49
      %p52 = scmp.ne.s32.totalorder %s35, %s51
      %p53 = scmp.eq.s32.totalorder %s27, 0
      %p54 = por %p52, %p53
      %s56 = sadd.s32 %s55, 1
      %p59 = scmp.eq.s32.totalorder %s21, 1
      %p60 = scmp.ne.s32.totalorder %s55, %s57
      %p61 = scmp.eq.s32.totalorder %s21, 0
      %p62 = por %p60, %p61
      %p63 = scmp.ne.s32.totalorder %s55, %s57
      %p64 = scmp.eq.s32.totalorder %s26, 1
      %p65 = por %p63, %p64
      %p66 = scmp.ne.s32.totalorder %s57, %s58
      %p67 = scmp.eq.s32.totalorder %s26, 0
      %p68 = por %p66, %p67
      %p69 = scmp.ne.s32.totalorder %s57, %s58
      %p70 = scmp.eq.s32.totalorder %s27, 1
      %p71 = por %p69, %p70
      %p73 = scmp.ne.s32.totalorder %s58, %s72
      %p74 = scmp.eq.s32.totalorder %s27, 0
      %p75 = por %p73, %p74
      %s77 = sadd.s32 %s76, 1
      %p80 = scmp.eq.s32.totalorder %s21, 1
      %p81 = scmp.ne.s32.totalorder %s76, %s78
      %p82 = scmp.eq.s32.totalorder %s21, 0
      %p83 = por %p81, %p82
      %p84 = scmp.ne.s32.totalorder %s76, %s78
      %p85 = scmp.eq.s32.totalorder %s26, 1
      %p86 = por %p84, %p85
      %p87 = scmp.ne.s32.totalorder %s78, %s79
      %p88 = scmp.eq.s32.totalorder %s26, 0
      %p89 = por %p87, %p88
      %p90 = scmp.ne.s32.totalorder %s78, %s79
      %p91 = scmp.eq.s32.totalorder %s27, 1
      %p92 = por %p90, %p91
      %p94 = scmp.ne.s32.totalorder %s79, %s93
      %p95 = scmp.eq.s32.totalorder %s27, 0
      %p96 = por %p94, %p95
      %s98 = sadd.s32 %s97, 1
      %p101 = scmp.eq.s32.totalorder %s21, 1
      %p102 = scmp.ne.s32.totalorder %s97, %s99
      %p103 = scmp.eq.s32.totalorder %s21, 0
      %p104 = por %p102, %p103
      %p105 = scmp.ne.s32.totalorder %s97, %s99
      %p106 = scmp.eq.s32.totalorder %s26, 1
      %p107 = por %p105, %p106
      %p108 = scmp.ne.s32.totalorder %s99, %s100
      %p109 = scmp.eq.s32.totalorder %s26, 0
      %p110 = por %p108, %p109
      %p111 = scmp.ne.s32.totalorder %s99, %s100
      %p112 = scmp.eq.s32.totalorder %s27, 1
      %p113 = por %p111, %p112
      %p115 = scmp.ne.s32.totalorder %s100, %s114
      %p116 = scmp.eq.s32.totalorder %s27, 0
      %p117 = por %p115, %p116
      %s119 = sadd.s32 %s118, 1
      %p122 = scmp.eq.s32.totalorder %s21, 1
      %p123 = scmp.ne.s32.totalorder %s118, %s120
      %p124 = scmp.eq.s32.totalorder %s21, 0
      %p125 = por %p123, %p124
      %p126 = scmp.ne.s32.totalorder %s118, %s120
      %p127 = scmp.eq.s32.totalorder %s26, 1
      %p128 = por %p126, %p127
      %p129 = scmp.ne.s32.totalorder %s120, %s121
      %p130 = scmp.eq.s32.totalorder %s26, 0
      %p131 = por %p129, %p130
      %p132 = scmp.ne.s32.totalorder %s120, %s121
      %p133 = scmp.eq.s32.totalorder %s27, 1
      %p134 = por %p132, %p133
      %p136 = scmp.ne.s32.totalorder %s121, %s135
      %p137 = scmp.eq.s32.totalorder %s27, 0
      %p138 = por %p136, %p137
      %s140 = sadd.s32 %s139, 1
      %p143 = scmp.eq.s32.totalorder %s21, 1
      %p144 = scmp.ne.s32.totalorder %s139, %s141
      %p145 = scmp.eq.s32.totalorder %s21, 0
      %p146 = por %p144, %p145
      %p147 = scmp.ne.s32.totalorder %s139, %s141
      %p148 = scmp.eq.s32.totalorder %s26, 1
      %p149 = por %p147, %p148
      %p150 = scmp.ne.s32.totalorder %s141, %s142
      %p151 = scmp.eq.s32.totalorder %s26, 0
      %p152 = por %p150, %p151
      %p153 = scmp.ne.s32.totalorder %s141, %s142
      %p154 = scmp.eq.s32.totalorder %s27, 1
      %p155 = por %p153, %p154
      %p157 = scmp.ne.s32.totalorder %s142, %s156
      %p158 = scmp.eq.s32.totalorder %s27, 0
      %p159 = por %p157, %p158
      %s161 = sadd.s32 %s160, 1
      %p164 = scmp.eq.s32.totalorder %s21, 1
      %p165 = scmp.ne.s32.totalorder %s160, %s162
      %p166 = scmp.eq.s32.totalorder %s21, 0
      %p167 = por %p165, %p166
      %p168 = scmp.ne.s32.totalorder %s160, %s162
      %p169 = scmp.eq.s32.totalorder %s26, 1
      %p170 = por %p168, %p169
      %p171 = scmp.ne.s32.totalorder %s162, %s163
      %p172 = scmp.eq.s32.totalorder %s26, 0
      %p173 = por %p171, %p172
      %p174 = scmp.ne.s32.totalorder %s162, %s163
      %p175 = scmp.eq.s32.totalorder %s27, 1
      %p176 = por %p174, %p175
      %p178 = scmp.ne.s32.totalorder %s163, %s177
      %p179 = scmp.eq.s32.totalorder %s27, 0
      %p180 = por %p178, %p179
      %s182 = sadd.s32 %s181, 1
      %p185 = scmp.eq.s32.totalorder %s21, 1
      %p186 = scmp.ne.s32.totalorder %s181, %s183
      %p187 = scmp.eq.s32.totalorder %s21, 0
      %p188 = por %p186, %p187
      %p189 = scmp.ne.s32.totalorder %s181, %s183
      %p190 = scmp.eq.s32.totalorder %s26, 1
      %p191 = por %p189, %p190
      %p192 = scmp.ne.s32.totalorder %s183, %s184
      %p193 = scmp.eq.s32.totalorder %s26, 0
      %p194 = por %p192, %p193
      %p195 = scmp.ne.s32.totalorder %s183, %s184
      %p196 = scmp.eq.s32.totalorder %s27, 1
      %p197 = por %p195, %p196
      %p199 = scmp.ne.s32.totalorder %s184, %s198
      %p200 = scmp.eq.s32.totalorder %s27, 0
      %p201 = por %p199, %p200
      %s203 = sadd.s32 %s202, 1
      %p206 = scmp.eq.s32.totalorder %s21, 1
      %p207 = scmp.ne.s32.totalorder %s202, %s204
      %p208 = scmp.eq.s32.totalorder %s21, 0
      %p209 = por %p207, %p208
      %p210 = scmp.ne.s32.totalorder %s202, %s204
      %p211 = scmp.eq.s32.totalorder %s26, 1
      %p212 = por %p210, %p211
      %p213 = scmp.ne.s32.totalorder %s204, %s205
      %p214 = scmp.eq.s32.totalorder %s26, 0
      %p215 = por %p213, %p214
      %p216 = scmp.ne.s32.totalorder %s204, %s205
      %p217 = scmp.eq.s32.totalorder %s27, 1
      %p218 = por %p216, %p217
      %p220 = scmp.ne.s32.totalorder %s205, %s219
      %p221 = scmp.eq.s32.totalorder %s27, 0
      %p222 = por %p220, %p221
      %s223 = ssub.s32 %s21, %s28
      %p224 = scmp.eq.s32.totalorder %s223, 0
      %s226 = sadd.s32 %s225, 1
      %s227 = scalar_select %p224, %s225, %s226
      %p230 = pneg %p224
      %p231 = scmp.eq.s32.totalorder %s21, 1
      %p232 = por %p230, %p231
      %p233 = scmp.ne.s32.totalorder %s225, %s228
      %p234 = scmp.eq.s32.totalorder %s21, 0
      %p235 = por %p233, %p234
      %p236 = scmp.ne.s32.totalorder %s225, %s228
      %p237 = scmp.eq.s32.totalorder %s26, 1
      %p238 = por %p236, %p237
      %p239 = scmp.ne.s32.totalorder %s228, %s229
      %p240 = scmp.eq.s32.totalorder %s26, 0
      %p241 = por %p239, %p240
      %p242 = scmp.ne.s32.totalorder %s228, %s229
      %p243 = scmp.eq.s32.totalorder %s27, 1
      %p244 = por %p242, %p243
      %p246 = scmp.ne.s32.totalorder %s229, %s245
      %p247 = scmp.eq.s32.totalorder %s27, 0
      %p248 = por %p246, %p247
      %p249 = scmp.le.s32.totalorder 1, %s21
      %p250 = scmp.lt.s32.totalorder %s21, 3
      %p251 = pnand %p249, %p250
      %p252 = pneg %p251
      // Predicated region
      $region9: #{tpu_custom_call.1} parent=5 // pred_check
        _
      $region10: #{tpu_custom_call.1} parent=5 // pred_check_branch
        %254 = sbr.rel (%p251) target = $region12
      $region11: #{tpu_custom_call.1} parent=5 // pred_region
        %s255 = ssub.s32 %s21, 1
        // Predicated region
        $region13: #{tpu_custom_call.1} parent=11 // pred_check
          %p256 = pneg %p68
        $region14: #{tpu_custom_call.1} parent=11 // pred_check_branch
          %258 = sbr.rel (%p256) target = $region16
        $region15: #{tpu_custom_call.1} parent=11 // pred_region
          %s260 = ssub.s32 7168, 7168
          %261 = vsyncadd [#allocation4], %s260
          %s262 = sshll.u32 [#allocation3], 4
          %s263 = int_to_ptr.vmem [resolvable:$true] %s262
          %268 = dma.hbm_to_vmem [thread:$0]  %s1, 7168, %s263, [#allocation4], 64, 64, 4
        $region16: #{tpu_custom_call.1} parent=11 // pred_fallthru
          _
        // Predicated region
        $region17: #{tpu_custom_call.1} parent=11 // pred_check
          %p269 = pneg %p89
        $region18: #{tpu_custom_call.1} parent=11 // pred_check_branch
          %271 = sbr.rel (%p269) target = $region20
        $region19: #{tpu_custom_call.1} parent=11 // pred_region
          %s273 = ssub.s32 5120, 5120
          %274 = vsyncadd [#allocation7], %s273
          %s275 = sshll.u32 [#allocation6], 4
          %s276 = int_to_ptr.vmem [resolvable:$true] %s275
          %281 = dma.hbm_to_vmem [thread:$0]  %s2, 5120, %s276, [#allocation7], 64, 64, 4
        $region20: #{tpu_custom_call.1} parent=11 // pred_fallthru
          _
        // Predicated region
        $region21: #{tpu_custom_call.1} parent=11 // pred_check
          %p282 = pneg %p110
        $region22: #{tpu_custom_call.1} parent=11 // pred_check_branch
          %284 = sbr.rel (%p282) target = $region24
        $region23: #{tpu_custom_call.1} parent=11 // pred_region
          %s286 = ssub.s32 3072, 3072
          %287 = vsyncadd [#allocation7], %s286
          %s288 = sshll.u32 [#allocation8], 4
          %s289 = int_to_ptr.vmem [resolvable:$true] %s288
          %294 = dma.hbm_to_vmem [thread:$0]  %s3, 3072, %s289, [#allocation7], 64, 64, 4
        $region24: #{tpu_custom_call.1} parent=11 // pred_fallthru
          _
        // Predicated region
        $region25: #{tpu_custom_call.1} parent=11 // pred_check
          %p295 = pneg %p131
        $region26: #{tpu_custom_call.1} parent=11 // pred_check_branch
          %297 = sbr.rel (%p295) target = $region28
        $region27: #{tpu_custom_call.1} parent=11 // pred_region
          %s299 = ssub.s32 1024, 1024
          %300 = vsyncadd [#allocation10], %s299
          %s301 = sshll.u32 [#allocation9], 4
          %s302 = int_to_ptr.vmem [resolvable:$true] %s301
          %307 = dma.hbm_to_vmem [thread:$0]  %s4, 1024, %s302, [#allocation10], 64, 64, 4
        $region28: #{tpu_custom_call.1} parent=11 // pred_fallthru
          _
        // Predicated region
        $region29: #{tpu_custom_call.1} parent=11 // pred_check
          %p308 = pneg %p152
        $region30: #{tpu_custom_call.1} parent=11 // pred_check_branch
          %310 = sbr.rel (%p308) target = $region32
        $region31: #{tpu_custom_call.1} parent=11 // pred_region
          _
        $region32: #{tpu_custom_call.1} parent=11 // pred_fallthru
          _
        // Predicated region
        $region33: #{tpu_custom_call.1} parent=11 // pred_check
          %p311 = pneg %p173
        $region34: #{tpu_custom_call.1} parent=11 // pred_check_branch
          %313 = sbr.rel (%p311) target = $region36
        $region35: #{tpu_custom_call.1} parent=11 // pred_region
          _
        $region36: #{tpu_custom_call.1} parent=11 // pred_fallthru
          _
        // Predicated region
        $region37: #{tpu_custom_call.1} parent=11 // pred_check
          %p314 = pneg %p194
        $region38: #{tpu_custom_call.1} parent=11 // pred_check_branch
          %316 = sbr.rel (%p314) target = $region40
        $region39: #{tpu_custom_call.1} parent=11 // pred_region
          _
        $region40: #{tpu_custom_call.1} parent=11 // pred_fallthru
          _
        // Predicated region
        $region41: #{tpu_custom_call.1} parent=11 // pred_check
          %p317 = pneg %p215
        $region42: #{tpu_custom_call.1} parent=11 // pred_check_branch
          %319 = sbr.rel (%p317) target = $region44
        $region43: #{tpu_custom_call.1} parent=11 // pred_region
          _
        $region44: #{tpu_custom_call.1} parent=11 // pred_fallthru
          _
      $region12: #{tpu_custom_call.1} parent=5 // pred_fallthru
        _
      %p320 = scmp.lt.s32.totalorder %s21, 2
      // Predicated region
      $region45: #{tpu_custom_call.1} parent=5 // pred_check
        %p321 = pneg %p320
      $region46: #{tpu_custom_call.1} parent=5 // pred_check_branch
        %323 = sbr.rel (%p321) target = $region48
      $region47: #{tpu_custom_call.1} parent=5 // pred_region
        // Predicated region
        $region49: #{tpu_custom_call.1} parent=47 // pred_check
          %p324 = pneg %p41
        $region50: #{tpu_custom_call.1} parent=47 // pred_check_branch
          %326 = sbr.rel (%p324) target = $region52
        $region51: #{tpu_custom_call.1} parent=47 // pred_region
          %p327 = scmp.lt.s32.totalorder %s21, 1
          %s328 = scalar_select %p327, %s21, 1
          %s329 = smul.addr %s328, 2
          %s330 = smul.addr %s329, 8
          %s331 = scalar_lea.vmem %s0, %s330
        $region52: #{tpu_custom_call.1} parent=47 // pred_fallthru
          _
      $region48: #{tpu_custom_call.1} parent=5 // pred_fallthru
        _
      %p332 = scmp.le.s32.totalorder 1, %s21
      %p333 = scmp.lt.s32.totalorder %s21, 3
      %p334 = pnand %p332, %p333
      %p335 = pneg %p334
      // Predicated region
      $region53: #{tpu_custom_call.1} parent=5 // pred_check
        _
      $region54: #{tpu_custom_call.1} parent=5 // pred_check_branch
        %337 = sbr.rel (%p334) target = $region56
      $region55: #{tpu_custom_call.1} parent=5 // pred_region
        %s338 = ssub.s32 %s21, 1
        // Predicated region
        $region57: #{tpu_custom_call.1} parent=55 // pred_check
          %p339 = pneg %p68
        $region58: #{tpu_custom_call.1} parent=55 // pred_check_branch
          %341 = sbr.rel (%p339) target = $region60
        $region59: #{tpu_custom_call.1} parent=55 // pred_region
          %342 = dma.done [#allocation4], 7168
        $region60: #{tpu_custom_call.1} parent=55 // pred_fallthru
          _
        // Predicated region
        $region61: #{tpu_custom_call.1} parent=55 // pred_check
          %p343 = pneg %p89
        $region62: #{tpu_custom_call.1} parent=55 // pred_check_branch
          %345 = sbr.rel (%p343) target = $region64
        $region63: #{tpu_custom_call.1} parent=55 // pred_region
          %346 = dma.done [#allocation7], 5120
        $region64: #{tpu_custom_call.1} parent=55 // pred_fallthru
          _
        // Predicated region
        $region65: #{tpu_custom_call.1} parent=55 // pred_check
          %p347 = pneg %p110
        $region66: #{tpu_custom_call.1} parent=55 // pred_check_branch
          %349 = sbr.rel (%p347) target = $region68
        $region67: #{tpu_custom_call.1} parent=55 // pred_region
          %350 = dma.done [#allocation7], 3072
        $region68: #{tpu_custom_call.1} parent=55 // pred_fallthru
          _
        // Predicated region
        $region69: #{tpu_custom_call.1} parent=55 // pred_check
          %p351 = pneg %p131
        $region70: #{tpu_custom_call.1} parent=55 // pred_check_branch
          %353 = sbr.rel (%p351) target = $region72
        $region71: #{tpu_custom_call.1} parent=55 // pred_region
          %354 = dma.done [#allocation10], 1024
        $region72: #{tpu_custom_call.1} parent=55 // pred_fallthru
          _
        %p355 = scmp.lt.s32.totalorder %s26, 1
        %s356 = scalar_select %p355, %s26, 1
        %s357 = smul.addr %s356, 2
        %s358 = smul.addr %s357, 8
        %s359 = scalar_lea.vmem %s0, %s358
        %p360 = pneg %p47
        %p361 = pneg %p44
        %p362 = pneg %p68
        %p363 = pneg %p65
        %p364 = pneg %p89
        %p365 = pneg %p86
        %p366 = pneg %p110
        %p367 = pneg %p107
        %p368 = pneg %p131
        %p369 = pneg %p128
        %p370 = pneg %p152
        %p371 = pneg %p149
        %p372 = pneg %p173
        %p373 = pneg %p170
        %p374 = pneg %p194
        %p375 = pneg %p191
        %p376 = pneg %p215
        %p377 = pneg %p212
        %p378 = pneg %p241
        %p379 = pneg %p238
        %s380 = sand.u32 %s228, 1
        %s381 = scalar_lea.sflag [#allocation5], %s380
        %s382 = sand.u32 %s228, 1
        %s383 = smul.addr %s382, 8
        %s384 = scalar_lea.vmem [#allocation11], %s383
        %p385 = scmp.lt.s32.totalorder %s26, 1
        %s386 = scalar_select %p385, %s26, 1
        %s387 = smul.addr %s386, 2
        %s388 = smul.addr %s387, 8
        %s389 = scalar_lea.vmem %s0, %s388
        %391 = vst [vmem:[#allocation2] sm:$0xf] 0
        %392 = vst [vmem:[#allocation2 + $0x8] sm:$0xf0] 0
        %393 = vst [vmem:[#allocation2] sm:$0xf0] 0
        %394 = vst [vmem:[#allocation2 + $0x8] sm:$0xf] 0
        %v395 = vld [vmem:[%s389] sm:$0xff]
        %v396 = vld [vmem:[%s389 + $0x8] sm:$0xff]
        %v397 = vpack.c.bf16 %v396, %v395
        %v399 = vrot.slane %v397, 4
        %vm401 = vcmask 31748
        %402 = vst.msk [vmem:[#allocation2] sm:$0xf0] %vm401, %v399
        %vm403 = vcmask 27648
        %404 = vst.msk [vmem:[#allocation2 + $0x8] sm:$0xf] %vm403, %v399
        %v405 = vld [vmem:[#allocation2] sm:$0xf0]
        %v406 = vld [vmem:[#allocation2 + $0x8] sm:$0xf]
        %v407 = vld [vmem:[#allocation9] sm:$0xf]
        %v408 = vld [vmem:[#allocation9 + $0x4] sm:$0xf]
        %v409 = vld [vmem:[#allocation9 + $0x8] sm:$0xf]
        %v410 = vld [vmem:[#allocation9 + $0xc] sm:$0xf]
        %v411 = vld [vmem:[#allocation9 + $0x10] sm:$0xf]
        %v412 = vld [vmem:[#allocation9 + $0x14] sm:$0xf]
        %v413 = vld [vmem:[#allocation9 + $0x18] sm:$0xf]
        %v414 = vld [vmem:[#allocation9 + $0x1c] sm:$0xf]
        %v415 = vld [vmem:[#allocation9 + $0x20] sm:$0xf]
        %v416 = vld [vmem:[#allocation9 + $0x24] sm:$0xf]
        %v417 = vld [vmem:[#allocation9 + $0x28] sm:$0xf]
        %v418 = vld [vmem:[#allocation9 + $0x2c] sm:$0xf]
        %v419 = vld [vmem:[#allocation9 + $0x30] sm:$0xf]
        %v420 = vld [vmem:[#allocation9 + $0x34] sm:$0xf]
        %v421 = vld [vmem:[#allocation9 + $0x38] sm:$0xf]
        %v422 = vld [vmem:[#allocation9 + $0x3c] sm:$0xf]
        %v423 = vld [vmem:[%s8] sm:$0x1]
        %v425 = vlaneseq
        %v426 = vshrl.u32 %v425, 7
        %v427 = vsub.s32 0, %v426
        %v428 = vrot.slane %v423, %v427
        %vm432 = vcmask 1043456
        %v433 = vrot.slane %v405, 4
        %v434 = vrot.slane %v406, 4
        %v435 = vsel %vm432, %v433, %v434
        %v453 = vunpack.c.l.b16 %v407
        %v454 = vunpack.c.l.b16 %v408
        %v455 = vunpack.c.l.b16 %v409
        %v456 = vunpack.c.l.b16 %v410
        %v457 = vunpack.c.l.b16 %v411
        %v458 = vunpack.c.l.b16 %v412
        %v459 = vunpack.c.l.b16 %v413
        %v460 = vunpack.c.l.b16 %v414
        %v461 = vunpack.c.l.b16 %v415
        %v462 = vunpack.c.l.b16 %v416
        %v463 = vunpack.c.l.b16 %v417
        %v464 = vunpack.c.l.b16 %v418
        %v465 = vunpack.c.l.b16 %v419
        %v466 = vunpack.c.l.b16 %v420
        %v467 = vunpack.c.l.b16 %v421
        %v468 = vunpack.c.l.b16 %v422
        %v469 = vpack.c.b16 %v454, %v453
        %v470 = vpack.c.b16 %v456, %v455
        %v471 = vpack.c.b16 %v458, %v457
        %v472 = vpack.c.b16 %v460, %v459
        %v473 = vpack.c.b16 %v462, %v461
        %v474 = vpack.c.b16 %v464, %v463
        %v475 = vpack.c.b16 %v466, %v465
        %v476 = vpack.c.b16 %v468, %v467
        %485 = vmatprep.subr.bf16.mxu0 0
        %486 = vmatpush1.bf16.msra.mxu0 %v469
        %487 = vmatprep.subr.bf16.mxu0 0
        %488 = vmatpush1.bf16.msra.mxu0 %v470
        %489 = vmatprep.subr.bf16.mxu0 0
        %490 = vmatpush1.bf16.msra.mxu0 %v471
        %491 = vmatprep.subr.bf16.mxu0 0
        %492 = vmatpush1.bf16.msra.mxu0 %v472
        %493 = vmatprep.subr.bf16.mxu0 0
        %494 = vmatpush1.bf16.msra.mxu0 %v473
        %495 = vmatprep.subr.bf16.mxu0 0
        %496 = vmatpush1.bf16.msra.mxu0 %v474
        %497 = vmatprep.subr.bf16.mxu0 0
        %498 = vmatpush1.bf16.msra.mxu0 %v475
        %499 = vmatprep.subr.bf16.mxu0 0
        %500 = vmatpush1.bf16.msra.mxu0 %v476
        %501 = vmatprep.subr.bf16.mxu0 0
        %502 = vmatpush1.bf16.msra.mxu0 0
        %503 = vmatprep.subr.bf16.mxu0 0
        %504 = vmatpush1.bf16.msra.mxu0 0
        %505 = vmatprep.subr.bf16.mxu0 0
        %506 = vmatpush1.bf16.msra.mxu0 0
        %507 = vmatprep.subr.bf16.mxu0 0
        %508 = vmatpush1.bf16.msra.mxu0 0
        %509 = vmatprep.subr.bf16.mxu0 0
        %510 = vmatpush1.bf16.msra.mxu0 0
        %511 = vmatprep.subr.bf16.mxu0 0
        %512 = vmatpush1.bf16.msra.mxu0 0
        %513 = vmatprep.subr.bf16.mxu0 0
        %514 = vmatpush1.bf16.msra.mxu0 0
        %515 = vmatprep.subr.bf16.mxu0 0
        %516 = vmatpush1.bf16.msra.mxu0 0
        %517 = vmatprep.mubr.bf16.mxu0 0
        %518 = vmatmul.mubr.bf16.gmra.mrb[0].mxu0 %v435
        %v519 = vpop.f32.mrb[0].mxu0
        %v520 = vadd.f32 %v428, %v519
        %v521 = vpop.f32.mrb[0].mxu0
        %v522 = vpop.f32.mrb[0].mxu0
        %v523 = vadd.f32 %v428, %v522
        %v524 = vpop.f32.mrb[0].mxu0
        %525 = vdwg.mxu0
        %v526 = vld [vmem:[#allocation2] sm:$0xfc]
        %v527 = vld [vmem:[#allocation2 + $0x8] sm:$0x7]
        %v528 = vld [vmem:[#allocation3] sm:$0xf]
        %v529 = vld [vmem:[#allocation3 + $0x4] sm:$0xf]
        %v530 = vld [vmem:[#allocation3 + $0x8] sm:$0xf]
        %v531 = vld [vmem:[#allocation3 + $0xc] sm:$0xf]
        %v532 = vld [vmem:[#allocation3 + $0x10] sm:$0xf]
        %v533 = vld [vmem:[#allocation3 + $0x14] sm:$0xf]
        %v534 = vld [vmem:[#allocation3 + $0x18] sm:$0xf]
        %v535 = vld [vmem:[#allocation3 + $0x1c] sm:$0xf]
        %v536 = vld [vmem:[#allocation3 + $0x20] sm:$0xf]
        %v537 = vld [vmem:[#allocation3 + $0x24] sm:$0xf]
        %v538 = vld [vmem:[#allocation3 + $0x28] sm:$0xf]
        %v539 = vld [vmem:[#allocation3 + $0x2c] sm:$0xf]
        %v540 = vld [vmem:[#allocation3 + $0x30] sm:$0xf]
        %v541 = vld [vmem:[#allocation3 + $0x34] sm:$0xf]
        %v542 = vld [vmem:[#allocation3 + $0x38] sm:$0xf]
        %v543 = vld [vmem:[#allocation3 + $0x3c] sm:$0xf]
        %v544 = vld [vmem:[#allocation2] sm:$0xf8]
        %s545 = scalar_lea.vmem [#allocation3], 64
        %v546 = vld [vmem:[%s545] sm:$0xf]
        %v547 = vld [vmem:[%s545 + $0x4] sm:$0xf]
        %v548 = vld [vmem:[%s545 + $0x8] sm:$0xf]
        %v549 = vld [vmem:[%s545 + $0xc] sm:$0xf]
        %v550 = vld [vmem:[%s545 + $0x10] sm:$0xf]
        %v551 = vld [vmem:[%s545 + $0x14] sm:$0xf]
        %v552 = vld [vmem:[%s545 + $0x18] sm:$0xf]
        %v553 = vld [vmem:[%s545 + $0x1c] sm:$0xf]
        %v554 = vld [vmem:[%s545 + $0x20] sm:$0xf]
        %v555 = vld [vmem:[%s545 + $0x24] sm:$0xf]
        %v556 = vld [vmem:[%s545 + $0x28] sm:$0xf]
        %v557 = vld [vmem:[%s545 + $0x2c] sm:$0xf]
        %v558 = vld [vmem:[%s545 + $0x30] sm:$0xf]
        %v559 = vld [vmem:[%s545 + $0x34] sm:$0xf]
        %v560 = vld [vmem:[%s545 + $0x38] sm:$0xf]
        %v561 = vld [vmem:[%s545 + $0x3c] sm:$0xf]
        %vm564 = vcmask 1044480
        %v565 = vrot.slane %v544, 3
        %v566 = vrot.slane %v527, 3
        %v567 = vsel %vm564, %v565, %v566
        %v585 = vunpack.c.l.b16 %v546
        %v586 = vunpack.c.l.b16 %v547
        %v587 = vunpack.c.l.b16 %v548
        %v588 = vunpack.c.l.b16 %v549
        %v589 = vunpack.c.l.b16 %v550
        %v590 = vunpack.c.l.b16 %v551
        %v591 = vunpack.c.l.b16 %v552
        %v592 = vunpack.c.l.b16 %v553
        %v593 = vunpack.c.l.b16 %v554
        %v594 = vunpack.c.l.b16 %v555
        %v595 = vunpack.c.l.b16 %v556
        %v596 = vunpack.c.l.b16 %v557
        %v597 = vunpack.c.l.b16 %v558
        %v598 = vunpack.c.l.b16 %v559
        %v599 = vunpack.c.l.b16 %v560
        %v600 = vunpack.c.l.b16 %v561
        %v601 = vpack.c.b16 %v586, %v585
        %v602 = vpack.c.b16 %v588, %v587
        %v603 = vpack.c.b16 %v590, %v589
        %v604 = vpack.c.b16 %v592, %v591
        %v605 = vpack.c.b16 %v594, %v593
        %v606 = vpack.c.b16 %v596, %v595
        %v607 = vpack.c.b16 %v598, %v597
        %v608 = vpack.c.b16 %v600, %v599
        %617 = vmatprep.subr.bf16.mxu0 0
        %618 = vmatpush1.bf16.msra.mxu0 %v601
        %619 = vmatprep.subr.bf16.mxu0 0
        %620 = vmatpush1.bf16.msra.mxu0 %v602
        %621 = vmatprep.subr.bf16.mxu0 0
        %622 = vmatpush1.bf16.msra.mxu0 %v603
        %623 = vmatprep.subr.bf16.mxu0 0
        %624 = vmatpush1.bf16.msra.mxu0 %v604
        %625 = vmatprep.subr.bf16.mxu0 0
        %626 = vmatpush1.bf16.msra.mxu0 %v605
        %627 = vmatprep.subr.bf16.mxu0 0
        %628 = vmatpush1.bf16.msra.mxu0 %v606
        %629 = vmatprep.subr.bf16.mxu0 0
        %630 = vmatpush1.bf16.msra.mxu0 %v607
        %631 = vmatprep.subr.bf16.mxu0 0
        %632 = vmatpush1.bf16.msra.mxu0 %v608
        %633 = vmatprep.subr.bf16.mxu0 0
        %634 = vmatpush1.bf16.msra.mxu0 0
        %635 = vmatprep.subr.bf16.mxu0 0
        %636 = vmatpush1.bf16.msra.mxu0 0
        %637 = vmatprep.subr.bf16.mxu0 0
        %638 = vmatpush1.bf16.msra.mxu0 0
        %639 = vmatprep.subr.bf16.mxu0 0
        %640 = vmatpush1.bf16.msra.mxu0 0
        %641 = vmatprep.subr.bf16.mxu0 0
        %642 = vmatpush1.bf16.msra.mxu0 0
        %643 = vmatprep.subr.bf16.mxu0 0
        %644 = vmatpush1.bf16.msra.mxu0 0
        %645 = vmatprep.subr.bf16.mxu0 0
        %646 = vmatpush1.bf16.msra.mxu0 0
        %647 = vmatprep.subr.bf16.mxu0 0
        %648 = vmatpush1.bf16.msra.mxu0 0
        %649 = vmatprep.mubr.bf16.mxu0 0
        %650 = vmatmul.mubr.bf16.gmra.mrb[0].mxu0 %v567
        %v651 = vpop.f32.mrb[0].mxu0
        %v652 = vadd.f32 0.0, %v651
        %v653 = vpop.f32.mrb[0].mxu0
        %v654 = vpop.f32.mrb[0].mxu0
        %v655 = vadd.f32 0.0, %v654
        %v656 = vpop.f32.mrb[0].mxu0
        %657 = vdwg.mxu0
        %vm658 = vsmask.f32 5376
        %v660 = vshrl.u32 %v526, 16
        %v662 = vrot.slane %v660, 2
        %v663 = vshll.u32 %v526, 16
        %v665 = vrot.slane %v663, 3
        %v666 = vor.u32 %v662, %v665
        %v668 = vshrl.u32 %v527, 16
        %v670 = vrot.slane %v668, 2
        %v671 = vshll.u32 %v527, 16
        %v673 = vrot.slane %v671, 3
        %v674 = vor.u32 %v670, %v673
        %v675 = vsel %vm658, %v666, %v674
        %v693 = vunpack.c.l.b16 %v528
        %v694 = vunpack.c.l.b16 %v529
        %v695 = vunpack.c.l.b16 %v530
        %v696 = vunpack.c.l.b16 %v531
        %v697 = vunpack.c.l.b16 %v532
        %v698 = vunpack.c.l.b16 %v533
        %v699 = vunpack.c.l.b16 %v534
        %v700 = vunpack.c.l.b16 %v535
        %v701 = vunpack.c.l.b16 %v536
        %v702 = vunpack.c.l.b16 %v537
        %v703 = vunpack.c.l.b16 %v538
        %v704 = vunpack.c.l.b16 %v539
        %v705 = vunpack.c.l.b16 %v540
        %v706 = vunpack.c.l.b16 %v541
        %v707 = vunpack.c.l.b16 %v542
        %v708 = vunpack.c.l.b16 %v543
        %v709 = vpack.c.b16 %v694, %v693
        %v710 = vpack.c.b16 %v696, %v695
        %v711 = vpack.c.b16 %v698, %v697
        %v712 = vpack.c.b16 %v700, %v699
        %v713 = vpack.c.b16 %v702, %v701
        %v714 = vpack.c.b16 %v704, %v703
        %v715 = vpack.c.b16 %v706, %v705
        %v716 = vpack.c.b16 %v708, %v707
        %725 = vmatprep.subr.bf16.mxu0 0
        %726 = vmatpush1.bf16.msra.mxu0 %v709
        %727 = vmatprep.subr.bf16.mxu0 0
        %728 = vmatpush1.bf16.msra.mxu0 %v710
        %729 = vmatprep.subr.bf16.mxu0 0
        %730 = vmatpush1.bf16.msra.mxu0 %v711
        %731 = vmatprep.subr.bf16.mxu0 0
        %732 = vmatpush1.bf16.msra.mxu0 %v712
        %733 = vmatprep.subr.bf16.mxu0 0
        %734 = vmatpush1.bf16.msra.mxu0 %v713
        %735 = vmatprep.subr.bf16.mxu0 0
        %736 = vmatpush1.bf16.msra.mxu0 %v714
        %737 = vmatprep.subr.bf16.mxu0 0
        %738 = vmatpush1.bf16.msra.mxu0 %v715
        %739 = vmatprep.subr.bf16.mxu0 0
        %740 = vmatpush1.bf16.msra.mxu0 %v716
        %741 = vmatprep.subr.bf16.mxu0 0
        %742 = vmatpush1.bf16.msra.mxu0 0
        %743 = vmatprep.subr.bf16.mxu0 0
        %744 = vmatpush1.bf16.msra.mxu0 0
        %745 = vmatprep.subr.bf16.mxu0 0
        %746 = vmatpush1.bf16.msra.mxu0 0
        %747 = vmatprep.subr.bf16.mxu0 0
        %748 = vmatpush1.bf16.msra.mxu0 0
        %749 = vmatprep.subr.bf16.mxu0 0
        %750 = vmatpush1.bf16.msra.mxu0 0
        %751 = vmatprep.subr.bf16.mxu0 0
        %752 = vmatpush1.bf16.msra.mxu0 0
        %753 = vmatprep.subr.bf16.mxu0 0
        %754 = vmatpush1.bf16.msra.mxu0 0
        %755 = vmatprep.subr.bf16.mxu0 0
        %756 = vmatpush1.bf16.msra.mxu0 0
        %757 = vmatprep.mubr.bf16.mxu0 0
        %758 = vmatmul.mubr.bf16.gmra.mrb[0].mxu0 %v675
        %v759 = vpop.f32.mrb[0].mxu0
        %v760 = vadd.f32 %v652, %v759
        %v761 = vpop.f32.mrb[0].mxu0
        %v762 = vpop.f32.mrb[0].mxu0
        %v763 = vadd.f32 %v655, %v762
        %v764 = vpop.f32.mrb[0].mxu0
        %765 = vdwg.mxu0
        %s766 = scalar_lea.vmem [#allocation3], 128
        %v767 = vld [vmem:[%s766] sm:$0xf]
        %v768 = vld [vmem:[%s766 + $0x4] sm:$0xf]
        %v769 = vld [vmem:[%s766 + $0x8] sm:$0xf]
        %v770 = vld [vmem:[%s766 + $0xc] sm:$0xf]
        %v771 = vld [vmem:[%s766 + $0x10] sm:$0xf]
        %v772 = vld [vmem:[%s766 + $0x14] sm:$0xf]
        %v773 = vld [vmem:[%s766 + $0x18] sm:$0xf]
        %v774 = vld [vmem:[%s766 + $0x1c] sm:$0xf]
        %v775 = vld [vmem:[%s766 + $0x20] sm:$0xf]
        %v776 = vld [vmem:[%s766 + $0x24] sm:$0xf]
        %v777 = vld [vmem:[%s766 + $0x28] sm:$0xf]
        %v778 = vld [vmem:[%s766 + $0x2c] sm:$0xf]
        %v779 = vld [vmem:[%s766 + $0x30] sm:$0xf]
        %v780 = vld [vmem:[%s766 + $0x34] sm:$0xf]
        %v781 = vld [vmem:[%s766 + $0x38] sm:$0xf]
        %v782 = vld [vmem:[%s766 + $0x3c] sm:$0xf]
        %vm783 = vsmask.f32 4352
        %v785 = vshrl.u32 %v544, 16
        %v787 = vrot.slane %v785, 3
        %v788 = vshll.u32 %v544, 16
        %v790 = vrot.slane %v788, 4
        %v791 = vor.u32 %v787, %v790
        %v793 = vshrl.u32 %v406, 16
        %v795 = vrot.slane %v793, 3
        %v796 = vshll.u32 %v406, 16
        %v798 = vrot.slane %v796, 4
        %v799 = vor.u32 %v795, %v798
        %v800 = vsel %vm783, %v791, %v799
        %v818 = vunpack.c.l.b16 %v767
        %v819 = vunpack.c.l.b16 %v768
        %v820 = vunpack.c.l.b16 %v769
        %v821 = vunpack.c.l.b16 %v770
        %v822 = vunpack.c.l.b16 %v771
        %v823 = vunpack.c.l.b16 %v772
        %v824 = vunpack.c.l.b16 %v773
        %v825 = vunpack.c.l.b16 %v774
        %v826 = vunpack.c.l.b16 %v775
        %v827 = vunpack.c.l.b16 %v776
        %v828 = vunpack.c.l.b16 %v777
        %v829 = vunpack.c.l.b16 %v778
        %v830 = vunpack.c.l.b16 %v779
        %v831 = vunpack.c.l.b16 %v780
        %v832 = vunpack.c.l.b16 %v781
        %v833 = vunpack.c.l.b16 %v782
        %v834 = vpack.c.b16 %v819, %v818
        %v835 = vpack.c.b16 %v821, %v820
        %v836 = vpack.c.b16 %v823, %v822
        %v837 = vpack.c.b16 %v825, %v824
        %v838 = vpack.c.b16 %v827, %v826
        %v839 = vpack.c.b16 %v829, %v828
        %v840 = vpack.c.b16 %v831, %v830
        %v841 = vpack.c.b16 %v833, %v832
        %850 = vmatprep.subr.bf16.mxu0 0
        %851 = vmatpush1.bf16.msra.mxu0 %v834
        %852 = vmatprep.subr.bf16.mxu0 0
        %853 = vmatpush1.bf16.msra.mxu0 %v835
        %854 = vmatprep.subr.bf16.mxu0 0
        %855 = vmatpush1.bf16.msra.mxu0 %v836
        %856 = vmatprep.subr.bf16.mxu0 0
        %857 = vmatpush1.bf16.msra.mxu0 %v837
        %858 = vmatprep.subr.bf16.mxu0 0
        %859 = vmatpush1.bf16.msra.mxu0 %v838
        %860 = vmatprep.subr.bf16.mxu0 0
        %861 = vmatpush1.bf16.msra.mxu0 %v839
        %862 = vmatprep.subr.bf16.mxu0 0
        %863 = vmatpush1.bf16.msra.mxu0 %v840
        %864 = vmatprep.subr.bf16.mxu0 0
        %865 = vmatpush1.bf16.msra.mxu0 %v841
        %866 = vmatprep.subr.bf16.mxu0 0
        %867 = vmatpush1.bf16.msra.mxu0 0
        %868 = vmatprep.subr.bf16.mxu0 0
        %869 = vmatpush1.bf16.msra.mxu0 0
        %870 = vmatprep.subr.bf16.mxu0 0
        %871 = vmatpush1.bf16.msra.mxu0 0
        %872 = vmatprep.subr.bf16.mxu0 0
        %873 = vmatpush1.bf16.msra.mxu0 0
        %874 = vmatprep.subr.bf16.mxu0 0
        %875 = vmatpush1.bf16.msra.mxu0 0
        %876 = vmatprep.subr.bf16.mxu0 0
        %877 = vmatpush1.bf16.msra.mxu0 0
        %878 = vmatprep.subr.bf16.mxu0 0
        %879 = vmatpush1.bf16.msra.mxu0 0
        %880 = vmatprep.subr.bf16.mxu0 0
        %881 = vmatpush1.bf16.msra.mxu0 0
        %882 = vmatprep.mubr.bf16.mxu0 0
        %883 = vmatmul.mubr.bf16.gmra.mrb[0].mxu0 %v800
        %v884 = vpop.f32.mrb[0].mxu0
        %v885 = vadd.f32 0.0, %v884
        %v886 = vpop.f32.mrb[0].mxu0
        %v887 = vpop.f32.mrb[0].mxu0
        %v888 = vadd.f32 0.0, %v887
        %v889 = vpop.f32.mrb[0].mxu0
        %890 = vdwg.mxu0
        %v891 = vadd.f32 %v760, %v885
        %v892 = vadd.f32 %v763, %v888
        %s893 = scalar_lea.vmem [#allocation3], 192
        %v894 = vld [vmem:[%s893] sm:$0xf]
        %v895 = vld [vmem:[%s893 + $0x4] sm:$0xf]
        %v896 = vld [vmem:[%s893 + $0x8] sm:$0xf]
        %v897 = vld [vmem:[%s893 + $0xc] sm:$0xf]
        %v898 = vld [vmem:[%s893 + $0x10] sm:$0xf]
        %v899 = vld [vmem:[%s893 + $0x14] sm:$0xf]
        %v900 = vld [vmem:[%s893 + $0x18] sm:$0xf]
        %v901 = vld [vmem:[%s893 + $0x1c] sm:$0xf]
        %v902 = vld [vmem:[%s893 + $0x20] sm:$0xf]
        %v903 = vld [vmem:[%s893 + $0x24] sm:$0xf]
        %v904 = vld [vmem:[%s893 + $0x28] sm:$0xf]
        %v905 = vld [vmem:[%s893 + $0x2c] sm:$0xf]
        %v906 = vld [vmem:[%s893 + $0x30] sm:$0xf]
        %v907 = vld [vmem:[%s893 + $0x34] sm:$0xf]
        %v908 = vld [vmem:[%s893 + $0x38] sm:$0xf]
        %v909 = vld [vmem:[%s893 + $0x3c] sm:$0xf]
        %v926 = vunpack.c.l.b16 %v894
        %v927 = vunpack.c.l.b16 %v895
        %v928 = vunpack.c.l.b16 %v896
        %v929 = vunpack.c.l.b16 %v897
        %v930 = vunpack.c.l.b16 %v898
        %v931 = vunpack.c.l.b16 %v899
        %v932 = vunpack.c.l.b16 %v900
        %v933 = vunpack.c.l.b16 %v901
        %v934 = vunpack.c.l.b16 %v902
        %v935 = vunpack.c.l.b16 %v903
        %v936 = vunpack.c.l.b16 %v904
        %v937 = vunpack.c.l.b16 %v905
        %v938 = vunpack.c.l.b16 %v906
        %v939 = vunpack.c.l.b16 %v907
        %v940 = vunpack.c.l.b16 %v908
        %v941 = vunpack.c.l.b16 %v909
        %v942 = vpack.c.b16 %v927, %v926
        %v943 = vpack.c.b16 %v929, %v928
        %v944 = vpack.c.b16 %v931, %v930
        %v945 = vpack.c.b16 %v933, %v932
        %v946 = vpack.c.b16 %v935, %v934
        %v947 = vpack.c.b16 %v937, %v936
        %v948 = vpack.c.b16 %v939, %v938
        %v949 = vpack.c.b16 %v941, %v940
        %958 = vmatprep.subr.bf16.mxu0 0
        %959 = vmatpush1.bf16.msra.mxu0 %v942
        %960 = vmatprep.subr.bf16.mxu0 0
        %961 = vmatpush1.bf16.msra.mxu0 %v943
        %962 = vmatprep.subr.bf16.mxu0 0
        %963 = vmatpush1.bf16.msra.mxu0 %v944
        %964 = vmatprep.subr.bf16.mxu0 0
        %965 = vmatpush1.bf16.msra.mxu0 %v945
        %966 = vmatprep.subr.bf16.mxu0 0
        %967 = vmatpush1.bf16.msra.mxu0 %v946
        %968 = vmatprep.subr.bf16.mxu0 0
        %969 = vmatpush1.bf16.msra.mxu0 %v947
        %970 = vmatprep.subr.bf16.mxu0 0
        %971 = vmatpush1.bf16.msra.mxu0 %v948
        %972 = vmatprep.subr.bf16.mxu0 0
        %973 = vmatpush1.bf16.msra.mxu0 %v949
        %974 = vmatprep.subr.bf16.mxu0 0
        %975 = vmatpush1.bf16.msra.mxu0 0
        %976 = vmatprep.subr.bf16.mxu0 0
        %977 = vmatpush1.bf16.msra.mxu0 0
        %978 = vmatprep.subr.bf16.mxu0 0
        %979 = vmatpush1.bf16.msra.mxu0 0
        %980 = vmatprep.subr.bf16.mxu0 0
        %981 = vmatpush1.bf16.msra.mxu0 0
        %982 = vmatprep.subr.bf16.mxu0 0
        %983 = vmatpush1.bf16.msra.mxu0 0
        %984 = vmatprep.subr.bf16.mxu0 0
        %985 = vmatpush1.bf16.msra.mxu0 0
        %986 = vmatprep.subr.bf16.mxu0 0
        %987 = vmatpush1.bf16.msra.mxu0 0
        %988 = vmatprep.subr.bf16.mxu0 0
        %989 = vmatpush1.bf16.msra.mxu0 0
        %990 = vmatprep.mubr.bf16.mxu0 0
        %991 = vmatmul.mubr.bf16.gmra.mrb[0].mxu0 %v435
        %v992 = vpop.f32.mrb[0].mxu0
        %v993 = vadd.f32 0.0, %v992
        %v994 = vpop.f32.mrb[0].mxu0
        %v995 = vpop.f32.mrb[0].mxu0
        %v996 = vadd.f32 0.0, %v995
        %v997 = vpop.f32.mrb[0].mxu0
        %998 = vdwg.mxu0
        %v999 = vadd.f32 %v891, %v993
        %v1000 = vadd.f32 %v892, %v996
        %v1001 = vld [vmem:[#allocation2 + $0x8] sm:$0x1f]
        %s1002 = scalar_lea.vmem [#allocation3], 256
        %v1003 = vld [vmem:[%s1002] sm:$0xf]
        %v1004 = vld [vmem:[%s1002 + $0x4] sm:$0xf]
        %v1005 = vld [vmem:[%s1002 + $0x8] sm:$0xf]
        %v1006 = vld [vmem:[%s1002 + $0xc] sm:$0xf]
        %v1007 = vld [vmem:[%s1002 + $0x10] sm:$0xf]
        %v1008 = vld [vmem:[%s1002 + $0x14] sm:$0xf]
        %v1009 = vld [vmem:[%s1002 + $0x18] sm:$0xf]
        %v1010 = vld [vmem:[%s1002 + $0x1c] sm:$0xf]
        %v1011 = vld [vmem:[%s1002 + $0x20] sm:$0xf]
        %v1012 = vld [vmem:[%s1002 + $0x24] sm:$0xf]
        %v1013 = vld [vmem:[%s1002 + $0x28] sm:$0xf]
        %v1014 = vld [vmem:[%s1002 + $0x2c] sm:$0xf]
        %v1015 = vld [vmem:[%s1002 + $0x30] sm:$0xf]
        %v1016 = vld [vmem:[%s1002 + $0x34] sm:$0xf]
        %v1017 = vld [vmem:[%s1002 + $0x38] sm:$0xf]
        %v1018 = vld [vmem:[%s1002 + $0x3c] sm:$0xf]
        %vm1019 = vsmask.f32 3328
        %v1021 = vshrl.u32 %v405, 16
        %v1023 = vrot.slane %v1021, 4
        %v1024 = vshll.u32 %v405, 16
        %v1026 = vrot.slane %v1024, 5
        %v1027 = vor.u32 %v1023, %v1026
        %v1029 = vshrl.u32 %v1001, 16
        %v1031 = vrot.slane %v1029, 4
        %v1032 = vshll.u32 %v1001, 16
        %v1034 = vrot.slane %v1032, 5
        %v1035 = vor.u32 %v1031, %v1034
        %v1036 = vsel %vm1019, %v1027, %v1035
        %v1054 = vunpack.c.l.b16 %v1003
        %v1055 = vunpack.c.l.b16 %v1004
        %v1056 = vunpack.c.l.b16 %v1005
        %v1057 = vunpack.c.l.b16 %v1006
        %v1058 = vunpack.c.l.b16 %v1007
        %v1059 = vunpack.c.l.b16 %v1008
        %v1060 = vunpack.c.l.b16 %v1009
        %v1061 = vunpack.c.l.b16 %v1010
        %v1062 = vunpack.c.l.b16 %v1011
        %v1063 = vunpack.c.l.b16 %v1012
        %v1064 = vunpack.c.l.b16 %v1013
        %v1065 = vunpack.c.l.b16 %v1014
        %v1066 = vunpack.c.l.b16 %v1015
        %v1067 = vunpack.c.l.b16 %v1016
        %v1068 = vunpack.c.l.b16 %v1017
        %v1069 = vunpack.c.l.b16 %v1018
        %v1070 = vpack.c.b16 %v1055, %v1054
        %v1071 = vpack.c.b16 %v1057, %v1056
        %v1072 = vpack.c.b16 %v1059, %v1058
        %v1073 = vpack.c.b16 %v1061, %v1060
        %v1074 = vpack.c.b16 %v1063, %v1062
        %v1075 = vpack.c.b16 %v1065, %v1064
        %v1076 = vpack.c.b16 %v1067, %v1066
        %v1077 = vpack.c.b16 %v1069, %v1068
        %1086 = vmatprep.subr.bf16.mxu0 0
        %1087 = vmatpush1.bf16.msra.mxu0 %v1070
        %1088 = vmatprep.subr.bf16.mxu0 0
        %1089 = vmatpush1.bf16.msra.mxu0 %v1071
        %1090 = vmatprep.subr.bf16.mxu0 0
        %1091 = vmatpush1.bf16.msra.mxu0 %v1072
        %1092 = vmatprep.subr.bf16.mxu0 0
        %1093 = vmatpush1.bf16.msra.mxu0 %v1073
        %1094 = vmatprep.subr.bf16.mxu0 0
        %1095 = vmatpush1.bf16.msra.mxu0 %v1074
        %1096 = vmatprep.subr.bf16.mxu0 0
        %1097 = vmatpush1.bf16.msra.mxu0 %v1075
        %1098 = vmatprep.subr.bf16.mxu0 0
        %1099 = vmatpush1.bf16.msra.mxu0 %v1076
        %1100 = vmatprep.subr.bf16.mxu0 0
        %1101 = vmatpush1.bf16.msra.mxu0 %v1077
        %1102 = vmatprep.subr.bf16.mxu0 0
        %1103 = vmatpush1.bf16.msra.mxu0 0
        %1104 = vmatprep.subr.bf16.mxu0 0
        %1105 = vmatpush1.bf16.msra.mxu0 0
        %1106 = vmatprep.subr.bf16.mxu0 0
        %1107 = vmatpush1.bf16.msra.mxu0 0
        %1108 = vmatprep.subr.bf16.mxu0 0
        %1109 = vmatpush1.bf16.msra.mxu0 0
        %1110 = vmatprep.subr.bf16.mxu0 0
        %1111 = vmatpush1.bf16.msra.mxu0 0
        %1112 = vmatprep.subr.bf16.mxu0 0
        %1113 = vmatpush1.bf16.msra.mxu0 0
        %1114 = vmatprep.subr.bf16.mxu0 0
        %1115 = vmatpush1.bf16.msra.mxu0 0
        %1116 = vmatprep.subr.bf16.mxu0 0
        %1117 = vmatpush1.bf16.msra.mxu0 0
        %1118 = vmatprep.mubr.bf16.mxu0 0
        %1119 = vmatmul.mubr.bf16.gmra.mrb[0].mxu0 %v1036
        %v1120 = vpop.f32.mrb[0].mxu0
        %v1121 = vadd.f32 0.0, %v1120
        %v1122 = vpop.f32.mrb[0].mxu0
        %v1123 = vpop.f32.mrb[0].mxu0
        %v1124 = vadd.f32 0.0, %v1123
        %v1125 = vpop.f32.mrb[0].mxu0
        %1126 = vdwg.mxu0
        %v1127 = vadd.f32 %v999, %v1121
        %v1128 = vadd.f32 %v1000, %v1124
        %v1129 = vld [vmem:[#allocation2] sm:$0xe0]
        %s1130 = scalar_lea.vmem [#allocation3], 320
        %v1131 = vld [vmem:[%s1130] sm:$0xf]
        %v1132 = vld [vmem:[%s1130 + $0x4] sm:$0xf]
        %v1133 = vld [vmem:[%s1130 + $0x8] sm:$0xf]
        %v1134 = vld [vmem:[%s1130 + $0xc] sm:$0xf]
        %v1135 = vld [vmem:[%s1130 + $0x10] sm:$0xf]
        %v1136 = vld [vmem:[%s1130 + $0x14] sm:$0xf]
        %v1137 = vld [vmem:[%s1130 + $0x18] sm:$0xf]
        %v1138 = vld [vmem:[%s1130 + $0x1c] sm:$0xf]
        %v1139 = vld [vmem:[%s1130 + $0x20] sm:$0xf]
        %v1140 = vld [vmem:[%s1130 + $0x24] sm:$0xf]
        %v1141 = vld [vmem:[%s1130 + $0x28] sm:$0xf]
        %v1142 = vld [vmem:[%s1130 + $0x2c] sm:$0xf]
        %v1143 = vld [vmem:[%s1130 + $0x30] sm:$0xf]
        %v1144 = vld [vmem:[%s1130 + $0x34] sm:$0xf]
        %v1145 = vld [vmem:[%s1130 + $0x38] sm:$0xf]
        %v1146 = vld [vmem:[%s1130 + $0x3c] sm:$0xf]
        %vm1149 = vcmask 1042432
        %v1150 = vrot.slane %v1129, 5
        %v1151 = vrot.slane %v1001, 5
        %v1152 = vsel %vm1149, %v1150, %v1151
        %v1170 = vunpack.c.l.b16 %v1131
        %v1171 = vunpack.c.l.b16 %v1132
        %v1172 = vunpack.c.l.b16 %v1133
        %v1173 = vunpack.c.l.b16 %v1134
        %v1174 = vunpack.c.l.b16 %v1135
        %v1175 = vunpack.c.l.b16 %v1136
        %v1176 = vunpack.c.l.b16 %v1137
        %v1177 = vunpack.c.l.b16 %v1138
        %v1178 = vunpack.c.l.b16 %v1139
        %v1179 = vunpack.c.l.b16 %v1140
        %v1180 = vunpack.c.l.b16 %v1141
        %v1181 = vunpack.c.l.b16 %v1142
        %v1182 = vunpack.c.l.b16 %v1143
        %v1183 = vunpack.c.l.b16 %v1144
        %v1184 = vunpack.c.l.b16 %v1145
        %v1185 = vunpack.c.l.b16 %v1146
        %v1186 = vpack.c.b16 %v1171, %v1170
        %v1187 = vpack.c.b16 %v1173, %v1172
        %v1188 = vpack.c.b16 %v1175, %v1174
        %v1189 = vpack.c.b16 %v1177, %v1176
        %v1190 = vpack.c.b16 %v1179, %v1178
        %v1191 = vpack.c.b16 %v1181, %v1180
        %v1192 = vpack.c.b16 %v1183, %v1182
        %v1193 = vpack.c.b16 %v1185, %v1184
        %1202 = vmatprep.subr.bf16.mxu0 0
        %1203 = vmatpush1.bf16.msra.mxu0 %v1186
        %1204 = vmatprep.subr.bf16.mxu0 0
        %1205 = vmatpush1.bf16.msra.mxu0 %v1187
        %1206 = vmatprep.subr.bf16.mxu0 0
        %1207 = vmatpush1.bf16.msra.mxu0 %v1188
        %1208 = vmatprep.subr.bf16.mxu0 0
        %1209 = vmatpush1.bf16.msra.mxu0 %v1189
        %1210 = vmatprep.subr.bf16.mxu0 0
        %1211 = vmatpush1.bf16.msra.mxu0 %v1190
        %1212 = vmatprep.subr.bf16.mxu0 0
        %1213 = vmatpush1.bf16.msra.mxu0 %v1191
        %1214 = vmatprep.subr.bf16.mxu0 0
        %1215 = vmatpush1.bf16.msra.mxu0 %v1192
        %1216 = vmatprep.subr.bf16.mxu0 0
        %1217 = vmatpush1.bf16.msra.mxu0 %v1193
        %1218 = vmatprep.subr.bf16.mxu0 0
        %1219 = vmatpush1.bf16.msra.mxu0 0
        %1220 = vmatprep.subr.bf16.mxu0 0
        %1221 = vmatpush1.bf16.msra.mxu0 0
        %1222 = vmatprep.subr.bf16.mxu0 0
        %1223 = vmatpush1.bf16.msra.mxu0 0
        %1224 = vmatprep.subr.bf16.mxu0 0
        %1225 = vmatpush1.bf16.msra.mxu0 0
        %1226 = vmatprep.subr.bf16.mxu0 0
        %1227 = vmatpush1.bf16.msra.mxu0 0
        %1228 = vmatprep.subr.bf16.mxu0 0
        %1229 = vmatpush1.bf16.msra.mxu0 0
        %1230 = vmatprep.subr.bf16.mxu0 0
        %1231 = vmatpush1.bf16.msra.mxu0 0
        %1232 = vmatprep.subr.bf16.mxu0 0
        %1233 = vmatpush1.bf16.msra.mxu0 0
        %1234 = vmatprep.mubr.bf16.mxu0 0
        %1235 = vmatmul.mubr.bf16.gmra.mrb[0].mxu0 %v1152
        %v1236 = vpop.f32.mrb[0].mxu0
        %v1237 = vadd.f32 0.0, %v1236
        %v1238 = vpop.f32.mrb[0].mxu0
        %v1239 = vpop.f32.mrb[0].mxu0
        %v1240 = vadd.f32 0.0, %v1239
        %v1241 = vpop.f32.mrb[0].mxu0
        %1242 = vdwg.mxu0
        %v1243 = vadd.f32 %v1127, %v1237
        %v1244 = vadd.f32 %v1128, %v1240
        %v1245 = vld [vmem:[#allocation2 + $0x8] sm:$0x3f]
        %s1246 = scalar_lea.vmem [#allocation3], 384
        %v1247 = vld [vmem:[%s1246] sm:$0xf]
        %v1248 = vld [vmem:[%s1246 + $0x4] sm:$0xf]
        %v1249 = vld [vmem:[%s1246 + $0x8] sm:$0xf]
        %v1250 = vld [vmem:[%s1246 + $0xc] sm:$0xf]
        %v1251 = vld [vmem:[%s1246 + $0x10] sm:$0xf]
        %v1252 = vld [vmem:[%s1246 + $0x14] sm:$0xf]
        %v1253 = vld [vmem:[%s1246 + $0x18] sm:$0xf]
        %v1254 = vld [vmem:[%s1246 + $0x1c] sm:$0xf]
        %v1255 = vld [vmem:[%s1246 + $0x20] sm:$0xf]
        %v1256 = vld [vmem:[%s1246 + $0x24] sm:$0xf]
        %v1257 = vld [vmem:[%s1246 + $0x28] sm:$0xf]
        %v1258 = vld [vmem:[%s1246 + $0x2c] sm:$0xf]
        %v1259 = vld [vmem:[%s1246 + $0x30] sm:$0xf]
        %v1260 = vld [vmem:[%s1246 + $0x34] sm:$0xf]
        %v1261 = vld [vmem:[%s1246 + $0x38] sm:$0xf]
        %v1262 = vld [vmem:[%s1246 + $0x3c] sm:$0xf]
        %vm1263 = vsmask.f32 2304
        %v1265 = vshrl.u32 %v1129, 16
        %v1267 = vrot.slane %v1265, 5
        %v1268 = vshll.u32 %v1129, 16
        %v1270 = vrot.slane %v1268, 6
        %v1271 = vor.u32 %v1267, %v1270
        %v1273 = vshrl.u32 %v1245, 16
        %v1275 = vrot.slane %v1273, 5
        %v1276 = vshll.u32 %v1245, 16
        %v1278 = vrot.slane %v1276, 6
        %v1279 = vor.u32 %v1275, %v1278
        %v1280 = vsel %vm1263, %v1271, %v1279
        %v1298 = vunpack.c.l.b16 %v1247
        %v1299 = vunpack.c.l.b16 %v1248
        %v1300 = vunpack.c.l.b16 %v1249
        %v1301 = vunpack.c.l.b16 %v1250
        %v1302 = vunpack.c.l.b16 %v1251
        %v1303 = vunpack.c.l.b16 %v1252
        %v1304 = vunpack.c.l.b16 %v1253
        %v1305 = vunpack.c.l.b16 %v1254
        %v1306 = vunpack.c.l.b16 %v1255
        %v1307 = vunpack.c.l.b16 %v1256
        %v1308 = vunpack.c.l.b16 %v1257
        %v1309 = vunpack.c.l.b16 %v1258
        %v1310 = vunpack.c.l.b16 %v1259
        %v1311 = vunpack.c.l.b16 %v1260
        %v1312 = vunpack.c.l.b16 %v1261
        %v1313 = vunpack.c.l.b16 %v1262
        %v1314 = vpack.c.b16 %v1299, %v1298
        %v1315 = vpack.c.b16 %v1301, %v1300
        %v1316 = vpack.c.b16 %v1303, %v1302
        %v1317 = vpack.c.b16 %v1305, %v1304
        %v1318 = vpack.c.b16 %v1307, %v1306
        %v1319 = vpack.c.b16 %v1309, %v1308
        %v1320 = vpack.c.b16 %v1311, %v1310
        %v1321 = vpack.c.b16 %v1313, %v1312
        %1330 = vmatprep.subr.bf16.mxu0 0
        %1331 = vmatpush1.bf16.msra.mxu0 %v1314
        %1332 = vmatprep.subr.bf16.mxu0 0
        %1333 = vmatpush1.bf16.msra.mxu0 %v1315
        %1334 = vmatprep.subr.bf16.mxu0 0
        %1335 = vmatpush1.bf16.msra.mxu0 %v1316
        %1336 = vmatprep.subr.bf16.mxu0 0
        %1337 = vmatpush1.bf16.msra.mxu0 %v1317
        %1338 = vmatprep.subr.bf16.mxu0 0
        %1339 = vmatpush1.bf16.msra.mxu0 %v1318
        %1340 = vmatprep.subr.bf16.mxu0 0
        %1341 = vmatpush1.bf16.msra.mxu0 %v1319
        %1342 = vmatprep.subr.bf16.mxu0 0
        %1343 = vmatpush1.bf16.msra.mxu0 %v1320
        %1344 = vmatprep.subr.bf16.mxu0 0
        %1345 = vmatpush1.bf16.msra.mxu0 %v1321
        %1346 = vmatprep.subr.bf16.mxu0 0
        %1347 = vmatpush1.bf16.msra.mxu0 0
        %1348 = vmatprep.subr.bf16.mxu0 0
        %1349 = vmatpush1.bf16.msra.mxu0 0
        %1350 = vmatprep.subr.bf16.mxu0 0
        %1351 = vmatpush1.bf16.msra.mxu0 0
        %1352 = vmatprep.subr.bf16.mxu0 0
        %1353 = vmatpush1.bf16.msra.mxu0 0
        %1354 = vmatprep.subr.bf16.mxu0 0
        %1355 = vmatpush1.bf16.msra.mxu0 0
        %1356 = vmatprep.subr.bf16.mxu0 0
        %1357 = vmatpush1.bf16.msra.mxu0 0
        %1358 = vmatprep.subr.bf16.mxu0 0
        %1359 = vmatpush1.bf16.msra.mxu0 0
        %1360 = vmatprep.subr.bf16.mxu0 0
        %1361 = vmatpush1.bf16.msra.mxu0 0
        %1362 = vmatprep.mubr.bf16.mxu0 0
        %1363 = vmatmul.mubr.bf16.gmra.mrb[0].mxu0 %v1280
        %v1364 = vpop.f32.mrb[0].mxu0
        %v1365 = vadd.f32 0.0, %v1364
        %v1366 = vpop.f32.mrb[0].mxu0
        %v1367 = vpop.f32.mrb[0].mxu0
        %v1368 = vadd.f32 0.0, %v1367
        %v1369 = vpop.f32.mrb[0].mxu0
        %1370 = vdwg.mxu0
        %v1371 = vadd.f32 %v1243, %v1365
        %v1372 = vadd.f32 %v1244, %v1368
        %v1373 = vld [vmem:[%s5] sm:$0x1]
        %v1375 = vlaneseq
        %v1376 = vshrl.u32 %v1375, 7
        %v1377 = vsub.s32 0, %v1376
        %v1378 = vrot.slane %v1373, %v1377
        %v1380 = vadd.f32 %v1371, %v1378
        %v1381 = vadd.f32 %v1372, %v1378
        %v1382 = vmax.f32 %v1380, 0.0
        %v1383 = vmax.f32 %v1381, 0.0
        %v1384 = vpack.c.bf16 %v1383, %v1382
        %v1386 = vrot.slane %v1384, 4
        %1388 = vst [vmem:[#allocation2] sm:$0xf0] %v1386
        %1389 = vst [vmem:[#allocation2 + $0x8] sm:$0xf] %v1386
        %v1390 = vld [vmem:[#allocation2] sm:$0xf8]
        %v1391 = vld [vmem:[#allocation2 + $0x8] sm:$0x7]
        %v1392 = vld [vmem:[#allocation6] sm:$0xf]
        %v1393 = vld [vmem:[#allocation6 + $0x4] sm:$0xf]
        %v1394 = vld [vmem:[#allocation6 + $0x8] sm:$0xf]
        %v1395 = vld [vmem:[#allocation6 + $0xc] sm:$0xf]
        %v1396 = vld [vmem:[#allocation6 + $0x10] sm:$0xf]
        %v1397 = vld [vmem:[#allocation6 + $0x14] sm:$0xf]
        %v1398 = vld [vmem:[#allocation6 + $0x18] sm:$0xf]
        %v1399 = vld [vmem:[#allocation6 + $0x1c] sm:$0xf]
        %v1400 = vld [vmem:[#allocation6 + $0x20] sm:$0xf]
        %v1401 = vld [vmem:[#allocation6 + $0x24] sm:$0xf]
        %v1402 = vld [vmem:[#allocation6 + $0x28] sm:$0xf]
        %v1403 = vld [vmem:[#allocation6 + $0x2c] sm:$0xf]
        %v1404 = vld [vmem:[#allocation6 + $0x30] sm:$0xf]
        %v1405 = vld [vmem:[#allocation6 + $0x34] sm:$0xf]
        %v1406 = vld [vmem:[#allocation6 + $0x38] sm:$0xf]
        %v1407 = vld [vmem:[#allocation6 + $0x3c] sm:$0xf]
        %v1408 = vld [vmem:[#allocation2 + $0x8] sm:$0xf]
        %s1409 = scalar_lea.vmem [#allocation6], 64
        %v1410 = vld [vmem:[%s1409] sm:$0xf]
        %v1411 = vld [vmem:[%s1409 + $0x4] sm:$0xf]
        %v1412 = vld [vmem:[%s1409 + $0x8] sm:$0xf]
        %v1413 = vld [vmem:[%s1409 + $0xc] sm:$0xf]
        %v1414 = vld [vmem:[%s1409 + $0x10] sm:$0xf]
        %v1415 = vld [vmem:[%s1409 + $0x14] sm:$0xf]
        %v1416 = vld [vmem:[%s1409 + $0x18] sm:$0xf]
        %v1417 = vld [vmem:[%s1409 + $0x1c] sm:$0xf]
        %v1418 = vld [vmem:[%s1409 + $0x20] sm:$0xf]
        %v1419 = vld [vmem:[%s1409 + $0x24] sm:$0xf]
        %v1420 = vld [vmem:[%s1409 + $0x28] sm:$0xf]
        %v1421 = vld [vmem:[%s1409 + $0x2c] sm:$0xf]
        %v1422 = vld [vmem:[%s1409 + $0x30] sm:$0xf]
        %v1423 = vld [vmem:[%s1409 + $0x34] sm:$0xf]
        %v1424 = vld [vmem:[%s1409 + $0x38] sm:$0xf]
        %v1425 = vld [vmem:[%s1409 + $0x3c] sm:$0xf]
        %v1427 = vshrl.u32 %v1390, 16
        %v1429 = vrot.slane %v1427, 3
        %v1430 = vshll.u32 %v1390, 16
        %v1432 = vrot.slane %v1430, 4
        %v1433 = vor.u32 %v1429, %v1432
        %v1435 = vshrl.u32 %v1408, 16
        %v1437 = vrot.slane %v1435, 3
        %v1438 = vshll.u32 %v1408, 16
        %v1440 = vrot.slane %v1438, 4
        %v1441 = vor.u32 %v1437, %v1440
        %v1442 = vsel %vm783, %v1433, %v1441
        %v1460 = vunpack.c.l.b16 %v1410
        %v1461 = vunpack.c.l.b16 %v1411
        %v1462 = vunpack.c.l.b16 %v1412
        %v1463 = vunpack.c.l.b16 %v1413
        %v1464 = vunpack.c.l.b16 %v1414
        %v1465 = vunpack.c.l.b16 %v1415
        %v1466 = vunpack.c.l.b16 %v1416
        %v1467 = vunpack.c.l.b16 %v1417
        %v1468 = vunpack.c.l.b16 %v1418
        %v1469 = vunpack.c.l.b16 %v1419
        %v1470 = vunpack.c.l.b16 %v1420
        %v1471 = vunpack.c.l.b16 %v1421
        %v1472 = vunpack.c.l.b16 %v1422
        %v1473 = vunpack.c.l.b16 %v1423
        %v1474 = vunpack.c.l.b16 %v1424
        %v1475 = vunpack.c.l.b16 %v1425
        %v1476 = vpack.c.b16 %v1461, %v1460
        %v1477 = vpack.c.b16 %v1463, %v1462
        %v1478 = vpack.c.b16 %v1465, %v1464
        %v1479 = vpack.c.b16 %v1467, %v1466
        %v1480 = vpack.c.b16 %v1469, %v1468
        %v1481 = vpack.c.b16 %v1471, %v1470
        %v1482 = vpack.c.b16 %v1473, %v1472
        %v1483 = vpack.c.b16 %v1475, %v1474
        %1492 = vmatprep.subr.bf16.mxu0 0
        %1493 = vmatpush1.bf16.msra.mxu0 %v1476
        %1494 = vmatprep.subr.bf16.mxu0 0
        %1495 = vmatpush1.bf16.msra.mxu0 %v1477
        %1496 = vmatprep.subr.bf16.mxu0 0
        %1497 = vmatpush1.bf16.msra.mxu0 %v1478
        %1498 = vmatprep.subr.bf16.mxu0 0
        %1499 = vmatpush1.bf16.msra.mxu0 %v1479
        %1500 = vmatprep.subr.bf16.mxu0 0
        %1501 = vmatpush1.bf16.msra.mxu0 %v1480
        %1502 = vmatprep.subr.bf16.mxu0 0
        %1503 = vmatpush1.bf16.msra.mxu0 %v1481
        %1504 = vmatprep.subr.bf16.mxu0 0
        %1505 = vmatpush1.bf16.msra.mxu0 %v1482
        %1506 = vmatprep.subr.bf16.mxu0 0
        %1507 = vmatpush1.bf16.msra.mxu0 %v1483
        %1508 = vmatprep.subr.bf16.mxu0 0
        %1509 = vmatpush1.bf16.msra.mxu0 0
        %1510 = vmatprep.subr.bf16.mxu0 0
        %1511 = vmatpush1.bf16.msra.mxu0 0
        %1512 = vmatprep.subr.bf16.mxu0 0
        %1513 = vmatpush1.bf16.msra.mxu0 0
        %1514 = vmatprep.subr.bf16.mxu0 0
        %1515 = vmatpush1.bf16.msra.mxu0 0
        %1516 = vmatprep.subr.bf16.mxu0 0
        %1517 = vmatpush1.bf16.msra.mxu0 0
        %1518 = vmatprep.subr.bf16.mxu0 0
        %1519 = vmatpush1.bf16.msra.mxu0 0
        %1520 = vmatprep.subr.bf16.mxu0 0
        %1521 = vmatpush1.bf16.msra.mxu0 0
        %1522 = vmatprep.subr.bf16.mxu0 0
        %1523 = vmatpush1.bf16.msra.mxu0 0
        %1524 = vmatprep.mubr.bf16.mxu0 0
        %1525 = vmatmul.mubr.bf16.gmra.mrb[0].mxu0 %v1442
        %v1526 = vpop.f32.mrb[0].mxu0
        %v1527 = vadd.f32 0.0, %v1526
        %v1528 = vpop.f32.mrb[0].mxu0
        %v1529 = vpop.f32.mrb[0].mxu0
        %v1530 = vadd.f32 0.0, %v1529
        %v1531 = vpop.f32.mrb[0].mxu0
        %1532 = vdwg.mxu0
        %v1535 = vrot.slane %v1390, 3
        %v1536 = vrot.slane %v1391, 3
        %v1537 = vsel %vm564, %v1535, %v1536
        %v1555 = vunpack.c.l.b16 %v1392
        %v1556 = vunpack.c.l.b16 %v1393
        %v1557 = vunpack.c.l.b16 %v1394
        %v1558 = vunpack.c.l.b16 %v1395
        %v1559 = vunpack.c.l.b16 %v1396
        %v1560 = vunpack.c.l.b16 %v1397
        %v1561 = vunpack.c.l.b16 %v1398
        %v1562 = vunpack.c.l.b16 %v1399
        %v1563 = vunpack.c.l.b16 %v1400
        %v1564 = vunpack.c.l.b16 %v1401
        %v1565 = vunpack.c.l.b16 %v1402
        %v1566 = vunpack.c.l.b16 %v1403
        %v1567 = vunpack.c.l.b16 %v1404
        %v1568 = vunpack.c.l.b16 %v1405
        %v1569 = vunpack.c.l.b16 %v1406
        %v1570 = vunpack.c.l.b16 %v1407
        %v1571 = vpack.c.b16 %v1556, %v1555
        %v1572 = vpack.c.b16 %v1558, %v1557
        %v1573 = vpack.c.b16 %v1560, %v1559
        %v1574 = vpack.c.b16 %v1562, %v1561
        %v1575 = vpack.c.b16 %v1564, %v1563
        %v1576 = vpack.c.b16 %v1566, %v1565
        %v1577 = vpack.c.b16 %v1568, %v1567
        %v1578 = vpack.c.b16 %v1570, %v1569
        %1587 = vmatprep.subr.bf16.mxu0 0
        %1588 = vmatpush1.bf16.msra.mxu0 %v1571
        %1589 = vmatprep.subr.bf16.mxu0 0
        %1590 = vmatpush1.bf16.msra.mxu0 %v1572
        %1591 = vmatprep.subr.bf16.mxu0 0
        %1592 = vmatpush1.bf16.msra.mxu0 %v1573
        %1593 = vmatprep.subr.bf16.mxu0 0
        %1594 = vmatpush1.bf16.msra.mxu0 %v1574
        %1595 = vmatprep.subr.bf16.mxu0 0
        %1596 = vmatpush1.bf16.msra.mxu0 %v1575
        %1597 = vmatprep.subr.bf16.mxu0 0
        %1598 = vmatpush1.bf16.msra.mxu0 %v1576
        %1599 = vmatprep.subr.bf16.mxu0 0
        %1600 = vmatpush1.bf16.msra.mxu0 %v1577
        %1601 = vmatprep.subr.bf16.mxu0 0
        %1602 = vmatpush1.bf16.msra.mxu0 %v1578
        %1603 = vmatprep.subr.bf16.mxu0 0
        %1604 = vmatpush1.bf16.msra.mxu0 0
        %1605 = vmatprep.subr.bf16.mxu0 0
        %1606 = vmatpush1.bf16.msra.mxu0 0
        %1607 = vmatprep.subr.bf16.mxu0 0
        %1608 = vmatpush1.bf16.msra.mxu0 0
        %1609 = vmatprep.subr.bf16.mxu0 0
        %1610 = vmatpush1.bf16.msra.mxu0 0
        %1611 = vmatprep.subr.bf16.mxu0 0
        %1612 = vmatpush1.bf16.msra.mxu0 0
        %1613 = vmatprep.subr.bf16.mxu0 0
        %1614 = vmatpush1.bf16.msra.mxu0 0
        %1615 = vmatprep.subr.bf16.mxu0 0
        %1616 = vmatpush1.bf16.msra.mxu0 0
        %1617 = vmatprep.subr.bf16.mxu0 0
        %1618 = vmatpush1.bf16.msra.mxu0 0
        %1619 = vmatprep.mubr.bf16.mxu0 0
        %1620 = vmatmul.mubr.bf16.gmra.mrb[0].mxu0 %v1537
        %v1621 = vpop.f32.mrb[0].mxu0
        %v1622 = vadd.f32 %v1527, %v1621
        %v1623 = vpop.f32.mrb[0].mxu0
        %v1624 = vpop.f32.mrb[0].mxu0
        %v1625 = vadd.f32 %v1530, %v1624
        %v1626 = vpop.f32.mrb[0].mxu0
        %1627 = vdwg.mxu0
        %v1628 = vld [vmem:[#allocation2] sm:$0xf0]
        %s1629 = scalar_lea.vmem [#allocation6], 128
        %v1630 = vld [vmem:[%s1629] sm:$0xf]
        %v1631 = vld [vmem:[%s1629 + $0x4] sm:$0xf]
        %v1632 = vld [vmem:[%s1629 + $0x8] sm:$0xf]
        %v1633 = vld [vmem:[%s1629 + $0xc] sm:$0xf]
        %v1634 = vld [vmem:[%s1629 + $0x10] sm:$0xf]
        %v1635 = vld [vmem:[%s1629 + $0x14] sm:$0xf]
        %v1636 = vld [vmem:[%s1629 + $0x18] sm:$0xf]
        %v1637 = vld [vmem:[%s1629 + $0x1c] sm:$0xf]
        %v1638 = vld [vmem:[%s1629 + $0x20] sm:$0xf]
        %v1639 = vld [vmem:[%s1629 + $0x24] sm:$0xf]
        %v1640 = vld [vmem:[%s1629 + $0x28] sm:$0xf]
        %v1641 = vld [vmem:[%s1629 + $0x2c] sm:$0xf]
        %v1642 = vld [vmem:[%s1629 + $0x30] sm:$0xf]
        %v1643 = vld [vmem:[%s1629 + $0x34] sm:$0xf]
        %v1644 = vld [vmem:[%s1629 + $0x38] sm:$0xf]
        %v1645 = vld [vmem:[%s1629 + $0x3c] sm:$0xf]
        %v1648 = vrot.slane %v1628, 4
        %v1649 = vrot.slane %v1408, 4
        %v1650 = vsel %vm432, %v1648, %v1649
        %v1668 = vunpack.c.l.b16 %v1630
        %v1669 = vunpack.c.l.b16 %v1631
        %v1670 = vunpack.c.l.b16 %v1632
        %v1671 = vunpack.c.l.b16 %v1633
        %v1672 = vunpack.c.l.b16 %v1634
        %v1673 = vunpack.c.l.b16 %v1635
        %v1674 = vunpack.c.l.b16 %v1636
        %v1675 = vunpack.c.l.b16 %v1637
        %v1676 = vunpack.c.l.b16 %v1638
        %v1677 = vunpack.c.l.b16 %v1639
        %v1678 = vunpack.c.l.b16 %v1640
        %v1679 = vunpack.c.l.b16 %v1641
        %v1680 = vunpack.c.l.b16 %v1642
        %v1681 = vunpack.c.l.b16 %v1643
        %v1682 = vunpack.c.l.b16 %v1644
        %v1683 = vunpack.c.l.b16 %v1645
        %v1684 = vpack.c.b16 %v1669, %v1668
        %v1685 = vpack.c.b16 %v1671, %v1670
        %v1686 = vpack.c.b16 %v1673, %v1672
        %v1687 = vpack.c.b16 %v1675, %v1674
        %v1688 = vpack.c.b16 %v1677, %v1676
        %v1689 = vpack.c.b16 %v1679, %v1678
        %v1690 = vpack.c.b16 %v1681, %v1680
        %v1691 = vpack.c.b16 %v1683, %v1682
        %1700 = vmatprep.subr.bf16.mxu0 0
        %1701 = vmatpush1.bf16.msra.mxu0 %v1684
        %1702 = vmatprep.subr.bf16.mxu0 0
        %1703 = vmatpush1.bf16.msra.mxu0 %v1685
        %1704 = vmatprep.subr.bf16.mxu0 0
        %1705 = vmatpush1.bf16.msra.mxu0 %v1686
        %1706 = vmatprep.subr.bf16.mxu0 0
        %1707 = vmatpush1.bf16.msra.mxu0 %v1687
        %1708 = vmatprep.subr.bf16.mxu0 0
        %1709 = vmatpush1.bf16.msra.mxu0 %v1688
        %1710 = vmatprep.subr.bf16.mxu0 0
        %1711 = vmatpush1.bf16.msra.mxu0 %v1689
        %1712 = vmatprep.subr.bf16.mxu0 0
        %1713 = vmatpush1.bf16.msra.mxu0 %v1690
        %1714 = vmatprep.subr.bf16.mxu0 0
        %1715 = vmatpush1.bf16.msra.mxu0 %v1691
        %1716 = vmatprep.subr.bf16.mxu0 0
        %1717 = vmatpush1.bf16.msra.mxu0 0
        %1718 = vmatprep.subr.bf16.mxu0 0
        %1719 = vmatpush1.bf16.msra.mxu0 0
        %1720 = vmatprep.subr.bf16.mxu0 0
        %1721 = vmatpush1.bf16.msra.mxu0 0
        %1722 = vmatprep.subr.bf16.mxu0 0
        %1723 = vmatpush1.bf16.msra.mxu0 0
        %1724 = vmatprep.subr.bf16.mxu0 0
        %1725 = vmatpush1.bf16.msra.mxu0 0
        %1726 = vmatprep.subr.bf16.mxu0 0
        %1727 = vmatpush1.bf16.msra.mxu0 0
        %1728 = vmatprep.subr.bf16.mxu0 0
        %1729 = vmatpush1.bf16.msra.mxu0 0
        %1730 = vmatprep.subr.bf16.mxu0 0
        %1731 = vmatpush1.bf16.msra.mxu0 0
        %1732 = vmatprep.mubr.bf16.mxu0 0
        %1733 = vmatmul.mubr.bf16.gmra.mrb[0].mxu0 %v1650
        %v1734 = vpop.f32.mrb[0].mxu0
        %v1735 = vadd.f32 0.0, %v1734
        %v1736 = vpop.f32.mrb[0].mxu0
        %v1737 = vpop.f32.mrb[0].mxu0
        %v1738 = vadd.f32 0.0, %v1737
        %v1739 = vpop.f32.mrb[0].mxu0
        %1740 = vdwg.mxu0
        %v1741 = vadd.f32 %v1622, %v1735
        %v1742 = vadd.f32 %v1625, %v1738
        %v1743 = vld [vmem:[#allocation2 + $0x8] sm:$0x1f]
        %s1744 = scalar_lea.vmem [#allocation6], 192
        %v1745 = vld [vmem:[%s1744] sm:$0xf]
        %v1746 = vld [vmem:[%s1744 + $0x4] sm:$0xf]
        %v1747 = vld [vmem:[%s1744 + $0x8] sm:$0xf]
        %v1748 = vld [vmem:[%s1744 + $0xc] sm:$0xf]
        %v1749 = vld [vmem:[%s1744 + $0x10] sm:$0xf]
        %v1750 = vld [vmem:[%s1744 + $0x14] sm:$0xf]
        %v1751 = vld [vmem:[%s1744 + $0x18] sm:$0xf]
        %v1752 = vld [vmem:[%s1744 + $0x1c] sm:$0xf]
        %v1753 = vld [vmem:[%s1744 + $0x20] sm:$0xf]
        %v1754 = vld [vmem:[%s1744 + $0x24] sm:$0xf]
        %v1755 = vld [vmem:[%s1744 + $0x28] sm:$0xf]
        %v1756 = vld [vmem:[%s1744 + $0x2c] sm:$0xf]
        %v1757 = vld [vmem:[%s1744 + $0x30] sm:$0xf]
        %v1758 = vld [vmem:[%s1744 + $0x34] sm:$0xf]
        %v1759 = vld [vmem:[%s1744 + $0x38] sm:$0xf]
        %v1760 = vld [vmem:[%s1744 + $0x3c] sm:$0xf]
        %v1762 = vshrl.u32 %v1628, 16
        %v1764 = vrot.slane %v1762, 4
        %v1765 = vshll.u32 %v1628, 16
        %v1767 = vrot.slane %v1765, 5
        %v1768 = vor.u32 %v1764, %v1767
        %v1770 = vshrl.u32 %v1743, 16
        %v1772 = vrot.slane %v1770, 4
        %v1773 = vshll.u32 %v1743, 16
        %v1775 = vrot.slane %v1773, 5
        %v1776 = vor.u32 %v1772, %v1775
        %v1777 = vsel %vm1019, %v1768, %v1776
        %v1795 = vunpack.c.l.b16 %v1745
        %v1796 = vunpack.c.l.b16 %v1746
        %v1797 = vunpack.c.l.b16 %v1747
        %v1798 = vunpack.c.l.b16 %v1748
        %v1799 = vunpack.c.l.b16 %v1749
        %v1800 = vunpack.c.l.b16 %v1750
        %v1801 = vunpack.c.l.b16 %v1751
        %v1802 = vunpack.c.l.b16 %v1752
        %v1803 = vunpack.c.l.b16 %v1753
        %v1804 = vunpack.c.l.b16 %v1754
        %v1805 = vunpack.c.l.b16 %v1755
        %v1806 = vunpack.c.l.b16 %v1756
        %v1807 = vunpack.c.l.b16 %v1757
        %v1808 = vunpack.c.l.b16 %v1758
        %v1809 = vunpack.c.l.b16 %v1759
        %v1810 = vunpack.c.l.b16 %v1760
        %v1811 = vpack.c.b16 %v1796, %v1795
        %v1812 = vpack.c.b16 %v1798, %v1797
        %v1813 = vpack.c.b16 %v1800, %v1799
        %v1814 = vpack.c.b16 %v1802, %v1801
        %v1815 = vpack.c.b16 %v1804, %v1803
        %v1816 = vpack.c.b16 %v1806, %v1805
        %v1817 = vpack.c.b16 %v1808, %v1807
        %v1818 = vpack.c.b16 %v1810, %v1809
        %1827 = vmatprep.subr.bf16.mxu0 0
        %1828 = vmatpush1.bf16.msra.mxu0 %v1811
        %1829 = vmatprep.subr.bf16.mxu0 0
        %1830 = vmatpush1.bf16.msra.mxu0 %v1812
        %1831 = vmatprep.subr.bf16.mxu0 0
        %1832 = vmatpush1.bf16.msra.mxu0 %v1813
        %1833 = vmatprep.subr.bf16.mxu0 0
        %1834 = vmatpush1.bf16.msra.mxu0 %v1814
        %1835 = vmatprep.subr.bf16.mxu0 0
        %1836 = vmatpush1.bf16.msra.mxu0 %v1815
        %1837 = vmatprep.subr.bf16.mxu0 0
        %1838 = vmatpush1.bf16.msra.mxu0 %v1816
        %1839 = vmatprep.subr.bf16.mxu0 0
        %1840 = vmatpush1.bf16.msra.mxu0 %v1817
        %1841 = vmatprep.subr.bf16.mxu0 0
        %1842 = vmatpush1.bf16.msra.mxu0 %v1818
        %1843 = vmatprep.subr.bf16.mxu0 0
        %1844 = vmatpush1.bf16.msra.mxu0 0
        %1845 = vmatprep.subr.bf16.mxu0 0
        %1846 = vmatpush1.bf16.msra.mxu0 0
        %1847 = vmatprep.subr.bf16.mxu0 0
        %1848 = vmatpush1.bf16.msra.mxu0 0
        %1849 = vmatprep.subr.bf16.mxu0 0
        %1850 = vmatpush1.bf16.msra.mxu0 0
        %1851 = vmatprep.subr.bf16.mxu0 0
        %1852 = vmatpush1.bf16.msra.mxu0 0
        %1853 = vmatprep.subr.bf16.mxu0 0
        %1854 = vmatpush1.bf16.msra.mxu0 0
        %1855 = vmatprep.subr.bf16.mxu0 0
        %1856 = vmatpush1.bf16.msra.mxu0 0
        %1857 = vmatprep.subr.bf16.mxu0 0
        %1858 = vmatpush1.bf16.msra.mxu0 0
        %1859 = vmatprep.mubr.bf16.mxu0 0
        %1860 = vmatmul.mubr.bf16.gmra.mrb[0].mxu0 %v1777
        %v1861 = vpop.f32.mrb[0].mxu0
        %v1862 = vadd.f32 0.0, %v1861
        %v1863 = vpop.f32.mrb[0].mxu0
        %v1864 = vpop.f32.mrb[0].mxu0
        %v1865 = vadd.f32 0.0, %v1864
        %v1866 = vpop.f32.mrb[0].mxu0
        %1867 = vdwg.mxu0
        %v1868 = vadd.f32 %v1741, %v1862
        %v1869 = vadd.f32 %v1742, %v1865
        %v1870 = vld [vmem:[#allocation2] sm:$0xe0]
        %s1871 = scalar_lea.vmem [#allocation6], 256
        %v1872 = vld [vmem:[%s1871] sm:$0xf]
        %v1873 = vld [vmem:[%s1871 + $0x4] sm:$0xf]
        %v1874 = vld [vmem:[%s1871 + $0x8] sm:$0xf]
        %v1875 = vld [vmem:[%s1871 + $0xc] sm:$0xf]
        %v1876 = vld [vmem:[%s1871 + $0x10] sm:$0xf]
        %v1877 = vld [vmem:[%s1871 + $0x14] sm:$0xf]
        %v1878 = vld [vmem:[%s1871 + $0x18] sm:$0xf]
        %v1879 = vld [vmem:[%s1871 + $0x1c] sm:$0xf]
        %v1880 = vld [vmem:[%s1871 + $0x20] sm:$0xf]
        %v1881 = vld [vmem:[%s1871 + $0x24] sm:$0xf]
        %v1882 = vld [vmem:[%s1871 + $0x28] sm:$0xf]
        %v1883 = vld [vmem:[%s1871 + $0x2c] sm:$0xf]
        %v1884 = vld [vmem:[%s1871 + $0x30] sm:$0xf]
        %v1885 = vld [vmem:[%s1871 + $0x34] sm:$0xf]
        %v1886 = vld [vmem:[%s1871 + $0x38] sm:$0xf]
        %v1887 = vld [vmem:[%s1871 + $0x3c] sm:$0xf]
        %v1890 = vrot.slane %v1870, 5
        %v1891 = vrot.slane %v1743, 5
        %v1892 = vsel %vm1149, %v1890, %v1891
        %v1910 = vunpack.c.l.b16 %v1872
        %v1911 = vunpack.c.l.b16 %v1873
        %v1912 = vunpack.c.l.b16 %v1874
        %v1913 = vunpack.c.l.b16 %v1875
        %v1914 = vunpack.c.l.b16 %v1876
        %v1915 = vunpack.c.l.b16 %v1877
        %v1916 = vunpack.c.l.b16 %v1878
        %v1917 = vunpack.c.l.b16 %v1879
        %v1918 = vunpack.c.l.b16 %v1880
        %v1919 = vunpack.c.l.b16 %v1881
        %v1920 = vunpack.c.l.b16 %v1882
        %v1921 = vunpack.c.l.b16 %v1883
        %v1922 = vunpack.c.l.b16 %v1884
        %v1923 = vunpack.c.l.b16 %v1885
        %v1924 = vunpack.c.l.b16 %v1886
        %v1925 = vunpack.c.l.b16 %v1887
        %v1926 = vpack.c.b16 %v1911, %v1910
        %v1927 = vpack.c.b16 %v1913, %v1912
        %v1928 = vpack.c.b16 %v1915, %v1914
        %v1929 = vpack.c.b16 %v1917, %v1916
        %v1930 = vpack.c.b16 %v1919, %v1918
        %v1931 = vpack.c.b16 %v1921, %v1920
        %v1932 = vpack.c.b16 %v1923, %v1922
        %v1933 = vpack.c.b16 %v1925, %v1924
        %1942 = vmatprep.subr.bf16.mxu0 0
        %1943 = vmatpush1.bf16.msra.mxu0 %v1926
        %1944 = vmatprep.subr.bf16.mxu0 0
        %1945 = vmatpush1.bf16.msra.mxu0 %v1927
        %1946 = vmatprep.subr.bf16.mxu0 0
        %1947 = vmatpush1.bf16.msra.mxu0 %v1928
        %1948 = vmatprep.subr.bf16.mxu0 0
        %1949 = vmatpush1.bf16.msra.mxu0 %v1929
        %1950 = vmatprep.subr.bf16.mxu0 0
        %1951 = vmatpush1.bf16.msra.mxu0 %v1930
        %1952 = vmatprep.subr.bf16.mxu0 0
        %1953 = vmatpush1.bf16.msra.mxu0 %v1931
        %1954 = vmatprep.subr.bf16.mxu0 0
        %1955 = vmatpush1.bf16.msra.mxu0 %v1932
        %1956 = vmatprep.subr.bf16.mxu0 0
        %1957 = vmatpush1.bf16.msra.mxu0 %v1933
        %1958 = vmatprep.subr.bf16.mxu0 0
        %1959 = vmatpush1.bf16.msra.mxu0 0
        %1960 = vmatprep.subr.bf16.mxu0 0
        %1961 = vmatpush1.bf16.msra.mxu0 0
        %1962 = vmatprep.subr.bf16.mxu0 0
        %1963 = vmatpush1.bf16.msra.mxu0 0
        %1964 = vmatprep.subr.bf16.mxu0 0
        %1965 = vmatpush1.bf16.msra.mxu0 0
        %1966 = vmatprep.subr.bf16.mxu0 0
        %1967 = vmatpush1.bf16.msra.mxu0 0
        %1968 = vmatprep.subr.bf16.mxu0 0
        %1969 = vmatpush1.bf16.msra.mxu0 0
        %1970 = vmatprep.subr.bf16.mxu0 0
        %1971 = vmatpush1.bf16.msra.mxu0 0
        %1972 = vmatprep.subr.bf16.mxu0 0
        %1973 = vmatpush1.bf16.msra.mxu0 0
        %1974 = vmatprep.mubr.bf16.mxu0 0
        %1975 = vmatmul.mubr.bf16.gmra.mrb[0].mxu0 %v1892
        %v1976 = vpop.f32.mrb[0].mxu0
        %v1977 = vadd.f32 0.0, %v1976
        %v1978 = vpop.f32.mrb[0].mxu0
        %v1979 = vpop.f32.mrb[0].mxu0
        %v1980 = vadd.f32 0.0, %v1979
        %v1981 = vpop.f32.mrb[0].mxu0
        %1982 = vdwg.mxu0
        %v1983 = vadd.f32 %v1868, %v1977
        %v1984 = vadd.f32 %v1869, %v1980
        %v1985 = vld [vmem:[%s6] sm:$0x1]
        %v1987 = vlaneseq
        %v1988 = vshrl.u32 %v1987, 7
        %v1989 = vsub.s32 0, %v1988
        %v1990 = vrot.slane %v1985, %v1989
        %v1992 = vadd.f32 %v1983, %v1990
        %v1993 = vadd.f32 %v1984, %v1990
        %v1994 = vmax.f32 %v1992, 0.0
        %v1995 = vmax.f32 %v1993, 0.0
        %v1996 = vpack.c.bf16 %v1995, %v1994
        %v1998 = vrot.slane %v1996, 4
        %2000 = vst [vmem:[#allocation2] sm:$0xf0] %v1998
        %2001 = vst [vmem:[#allocation2 + $0x8] sm:$0xf] %v1998
        %v2002 = vld [vmem:[#allocation2] sm:$0xf8]
        %v2003 = vld [vmem:[#allocation2 + $0x8] sm:$0xf]
        %v2004 = vld [vmem:[#allocation8] sm:$0xf]
        %v2005 = vld [vmem:[#allocation8 + $0x4] sm:$0xf]
        %v2006 = vld [vmem:[#allocation8 + $0x8] sm:$0xf]
        %v2007 = vld [vmem:[#allocation8 + $0xc] sm:$0xf]
        %v2008 = vld [vmem:[#allocation8 + $0x10] sm:$0xf]
        %v2009 = vld [vmem:[#allocation8 + $0x14] sm:$0xf]
        %v2010 = vld [vmem:[#allocation8 + $0x18] sm:$0xf]
        %v2011 = vld [vmem:[#allocation8 + $0x1c] sm:$0xf]
        %v2012 = vld [vmem:[#allocation8 + $0x20] sm:$0xf]
        %v2013 = vld [vmem:[#allocation8 + $0x24] sm:$0xf]
        %v2014 = vld [vmem:[#allocation8 + $0x28] sm:$0xf]
        %v2015 = vld [vmem:[#allocation8 + $0x2c] sm:$0xf]
        %v2016 = vld [vmem:[#allocation8 + $0x30] sm:$0xf]
        %v2017 = vld [vmem:[#allocation8 + $0x34] sm:$0xf]
        %v2018 = vld [vmem:[#allocation8 + $0x38] sm:$0xf]
        %v2019 = vld [vmem:[#allocation8 + $0x3c] sm:$0xf]
        %v2020 = vld [vmem:[#allocation2] sm:$0xf0]
        %s2021 = scalar_lea.vmem [#allocation8], 64
        %v2022 = vld [vmem:[%s2021] sm:$0xf]
        %v2023 = vld [vmem:[%s2021 + $0x4] sm:$0xf]
        %v2024 = vld [vmem:[%s2021 + $0x8] sm:$0xf]
        %v2025 = vld [vmem:[%s2021 + $0xc] sm:$0xf]
        %v2026 = vld [vmem:[%s2021 + $0x10] sm:$0xf]
        %v2027 = vld [vmem:[%s2021 + $0x14] sm:$0xf]
        %v2028 = vld [vmem:[%s2021 + $0x18] sm:$0xf]
        %v2029 = vld [vmem:[%s2021 + $0x1c] sm:$0xf]
        %v2030 = vld [vmem:[%s2021 + $0x20] sm:$0xf]
        %v2031 = vld [vmem:[%s2021 + $0x24] sm:$0xf]
        %v2032 = vld [vmem:[%s2021 + $0x28] sm:$0xf]
        %v2033 = vld [vmem:[%s2021 + $0x2c] sm:$0xf]
        %v2034 = vld [vmem:[%s2021 + $0x30] sm:$0xf]
        %v2035 = vld [vmem:[%s2021 + $0x34] sm:$0xf]
        %v2036 = vld [vmem:[%s2021 + $0x38] sm:$0xf]
        %v2037 = vld [vmem:[%s2021 + $0x3c] sm:$0xf]
        %v2040 = vrot.slane %v2020, 4
        %v2041 = vrot.slane %v2003, 4
        %v2042 = vsel %vm432, %v2040, %v2041
        %v2060 = vunpack.c.l.b16 %v2022
        %v2061 = vunpack.c.l.b16 %v2023
        %v2062 = vunpack.c.l.b16 %v2024
        %v2063 = vunpack.c.l.b16 %v2025
        %v2064 = vunpack.c.l.b16 %v2026
        %v2065 = vunpack.c.l.b16 %v2027
        %v2066 = vunpack.c.l.b16 %v2028
        %v2067 = vunpack.c.l.b16 %v2029
        %v2068 = vunpack.c.l.b16 %v2030
        %v2069 = vunpack.c.l.b16 %v2031
        %v2070 = vunpack.c.l.b16 %v2032
        %v2071 = vunpack.c.l.b16 %v2033
        %v2072 = vunpack.c.l.b16 %v2034
        %v2073 = vunpack.c.l.b16 %v2035
        %v2074 = vunpack.c.l.b16 %v2036
        %v2075 = vunpack.c.l.b16 %v2037
        %v2076 = vpack.c.b16 %v2061, %v2060
        %v2077 = vpack.c.b16 %v2063, %v2062
        %v2078 = vpack.c.b16 %v2065, %v2064
        %v2079 = vpack.c.b16 %v2067, %v2066
        %v2080 = vpack.c.b16 %v2069, %v2068
        %v2081 = vpack.c.b16 %v2071, %v2070
        %v2082 = vpack.c.b16 %v2073, %v2072
        %v2083 = vpack.c.b16 %v2075, %v2074
        %2092 = vmatprep.subr.bf16.mxu0 0
        %2093 = vmatpush1.bf16.msra.mxu0 %v2076
        %2094 = vmatprep.subr.bf16.mxu0 0
        %2095 = vmatpush1.bf16.msra.mxu0 %v2077
        %2096 = vmatprep.subr.bf16.mxu0 0
        %2097 = vmatpush1.bf16.msra.mxu0 %v2078
        %2098 = vmatprep.subr.bf16.mxu0 0
        %2099 = vmatpush1.bf16.msra.mxu0 %v2079
        %2100 = vmatprep.subr.bf16.mxu0 0
        %2101 = vmatpush1.bf16.msra.mxu0 %v2080
        %2102 = vmatprep.subr.bf16.mxu0 0
        %2103 = vmatpush1.bf16.msra.mxu0 %v2081
        %2104 = vmatprep.subr.bf16.mxu0 0
        %2105 = vmatpush1.bf16.msra.mxu0 %v2082
        %2106 = vmatprep.subr.bf16.mxu0 0
        %2107 = vmatpush1.bf16.msra.mxu0 %v2083
        %2108 = vmatprep.subr.bf16.mxu0 0
        %2109 = vmatpush1.bf16.msra.mxu0 0
        %2110 = vmatprep.subr.bf16.mxu0 0
        %2111 = vmatpush1.bf16.msra.mxu0 0
        %2112 = vmatprep.subr.bf16.mxu0 0
        %2113 = vmatpush1.bf16.msra.mxu0 0
        %2114 = vmatprep.subr.bf16.mxu0 0
        %2115 = vmatpush1.bf16.msra.mxu0 0
        %2116 = vmatprep.subr.bf16.mxu0 0
        %2117 = vmatpush1.bf16.msra.mxu0 0
        %2118 = vmatprep.subr.bf16.mxu0 0
        %2119 = vmatpush1.bf16.msra.mxu0 0
        %2120 = vmatprep.subr.bf16.mxu0 0
        %2121 = vmatpush1.bf16.msra.mxu0 0
        %2122 = vmatprep.subr.bf16.mxu0 0
        %2123 = vmatpush1.bf16.msra.mxu0 0
        %2124 = vmatprep.mubr.bf16.mxu0 0
        %2125 = vmatmul.mubr.bf16.gmra.mrb[0].mxu0 %v2042
        %v2126 = vpop.f32.mrb[0].mxu0
        %v2127 = vadd.f32 0.0, %v2126
        %v2128 = vpop.f32.mrb[0].mxu0
        %v2129 = vpop.f32.mrb[0].mxu0
        %v2130 = vadd.f32 0.0, %v2129
        %v2131 = vpop.f32.mrb[0].mxu0
        %2132 = vdwg.mxu0
        %v2134 = vshrl.u32 %v2002, 16
        %v2136 = vrot.slane %v2134, 3
        %v2137 = vshll.u32 %v2002, 16
        %v2139 = vrot.slane %v2137, 4
        %v2140 = vor.u32 %v2136, %v2139
        %v2142 = vshrl.u32 %v2003, 16
        %v2144 = vrot.slane %v2142, 3
        %v2145 = vshll.u32 %v2003, 16
        %v2147 = vrot.slane %v2145, 4
        %v2148 = vor.u32 %v2144, %v2147
        %v2149 = vsel %vm783, %v2140, %v2148
        %v2167 = vunpack.c.l.b16 %v2004
        %v2168 = vunpack.c.l.b16 %v2005
        %v2169 = vunpack.c.l.b16 %v2006
        %v2170 = vunpack.c.l.b16 %v2007
        %v2171 = vunpack.c.l.b16 %v2008
        %v2172 = vunpack.c.l.b16 %v2009
        %v2173 = vunpack.c.l.b16 %v2010
        %v2174 = vunpack.c.l.b16 %v2011
        %v2175 = vunpack.c.l.b16 %v2012
        %v2176 = vunpack.c.l.b16 %v2013
        %v2177 = vunpack.c.l.b16 %v2014
        %v2178 = vunpack.c.l.b16 %v2015
        %v2179 = vunpack.c.l.b16 %v2016
        %v2180 = vunpack.c.l.b16 %v2017
        %v2181 = vunpack.c.l.b16 %v2018
        %v2182 = vunpack.c.l.b16 %v2019
        %v2183 = vpack.c.b16 %v2168, %v2167
        %v2184 = vpack.c.b16 %v2170, %v2169
        %v2185 = vpack.c.b16 %v2172, %v2171
        %v2186 = vpack.c.b16 %v2174, %v2173
        %v2187 = vpack.c.b16 %v2176, %v2175
        %v2188 = vpack.c.b16 %v2178, %v2177
        %v2189 = vpack.c.b16 %v2180, %v2179
        %v2190 = vpack.c.b16 %v2182, %v2181
        %2199 = vmatprep.subr.bf16.mxu0 0
        %2200 = vmatpush1.bf16.msra.mxu0 %v2183
        %2201 = vmatprep.subr.bf16.mxu0 0
        %2202 = vmatpush1.bf16.msra.mxu0 %v2184
        %2203 = vmatprep.subr.bf16.mxu0 0
        %2204 = vmatpush1.bf16.msra.mxu0 %v2185
        %2205 = vmatprep.subr.bf16.mxu0 0
        %2206 = vmatpush1.bf16.msra.mxu0 %v2186
        %2207 = vmatprep.subr.bf16.mxu0 0
        %2208 = vmatpush1.bf16.msra.mxu0 %v2187
        %2209 = vmatprep.subr.bf16.mxu0 0
        %2210 = vmatpush1.bf16.msra.mxu0 %v2188
        %2211 = vmatprep.subr.bf16.mxu0 0
        %2212 = vmatpush1.bf16.msra.mxu0 %v2189
        %2213 = vmatprep.subr.bf16.mxu0 0
        %2214 = vmatpush1.bf16.msra.mxu0 %v2190
        %2215 = vmatprep.subr.bf16.mxu0 0
        %2216 = vmatpush1.bf16.msra.mxu0 0
        %2217 = vmatprep.subr.bf16.mxu0 0
        %2218 = vmatpush1.bf16.msra.mxu0 0
        %2219 = vmatprep.subr.bf16.mxu0 0
        %2220 = vmatpush1.bf16.msra.mxu0 0
        %2221 = vmatprep.subr.bf16.mxu0 0
        %2222 = vmatpush1.bf16.msra.mxu0 0
        %2223 = vmatprep.subr.bf16.mxu0 0
        %2224 = vmatpush1.bf16.msra.mxu0 0
        %2225 = vmatprep.subr.bf16.mxu0 0
        %2226 = vmatpush1.bf16.msra.mxu0 0
        %2227 = vmatprep.subr.bf16.mxu0 0
        %2228 = vmatpush1.bf16.msra.mxu0 0
        %2229 = vmatprep.subr.bf16.mxu0 0
        %2230 = vmatpush1.bf16.msra.mxu0 0
        %2231 = vmatprep.mubr.bf16.mxu0 0
        %2232 = vmatmul.mubr.bf16.gmra.mrb[0].mxu0 %v2149
        %v2233 = vpop.f32.mrb[0].mxu0
        %v2234 = vadd.f32 %v2127, %v2233
        %v2235 = vpop.f32.mrb[0].mxu0
        %v2236 = vpop.f32.mrb[0].mxu0
        %v2237 = vadd.f32 %v2130, %v2236
        %v2238 = vpop.f32.mrb[0].mxu0
        %2239 = vdwg.mxu0
        %v2240 = vld [vmem:[#allocation2 + $0x8] sm:$0x1f]
        %s2241 = scalar_lea.vmem [#allocation8], 128
        %v2242 = vld [vmem:[%s2241] sm:$0xf]
        %v2243 = vld [vmem:[%s2241 + $0x4] sm:$0xf]
        %v2244 = vld [vmem:[%s2241 + $0x8] sm:$0xf]
        %v2245 = vld [vmem:[%s2241 + $0xc] sm:$0xf]
        %v2246 = vld [vmem:[%s2241 + $0x10] sm:$0xf]
        %v2247 = vld [vmem:[%s2241 + $0x14] sm:$0xf]
        %v2248 = vld [vmem:[%s2241 + $0x18] sm:$0xf]
        %v2249 = vld [vmem:[%s2241 + $0x1c] sm:$0xf]
        %v2250 = vld [vmem:[%s2241 + $0x20] sm:$0xf]
        %v2251 = vld [vmem:[%s2241 + $0x24] sm:$0xf]
        %v2252 = vld [vmem:[%s2241 + $0x28] sm:$0xf]
        %v2253 = vld [vmem:[%s2241 + $0x2c] sm:$0xf]
        %v2254 = vld [vmem:[%s2241 + $0x30] sm:$0xf]
        %v2255 = vld [vmem:[%s2241 + $0x34] sm:$0xf]
        %v2256 = vld [vmem:[%s2241 + $0x38] sm:$0xf]
        %v2257 = vld [vmem:[%s2241 + $0x3c] sm:$0xf]
        %v2259 = vshrl.u32 %v2020, 16
        %v2261 = vrot.slane %v2259, 4
        %v2262 = vshll.u32 %v2020, 16
        %v2264 = vrot.slane %v2262, 5
        %v2265 = vor.u32 %v2261, %v2264
        %v2267 = vshrl.u32 %v2240, 16
        %v2269 = vrot.slane %v2267, 4
        %v2270 = vshll.u32 %v2240, 16
        %v2272 = vrot.slane %v2270, 5
        %v2273 = vor.u32 %v2269, %v2272
        %v2274 = vsel %vm1019, %v2265, %v2273
        %v2292 = vunpack.c.l.b16 %v2242
        %v2293 = vunpack.c.l.b16 %v2243
        %v2294 = vunpack.c.l.b16 %v2244
        %v2295 = vunpack.c.l.b16 %v2245
        %v2296 = vunpack.c.l.b16 %v2246
        %v2297 = vunpack.c.l.b16 %v2247
        %v2298 = vunpack.c.l.b16 %v2248
        %v2299 = vunpack.c.l.b16 %v2249
        %v2300 = vunpack.c.l.b16 %v2250
        %v2301 = vunpack.c.l.b16 %v2251
        %v2302 = vunpack.c.l.b16 %v2252
        %v2303 = vunpack.c.l.b16 %v2253
        %v2304 = vunpack.c.l.b16 %v2254
        %v2305 = vunpack.c.l.b16 %v2255
        %v2306 = vunpack.c.l.b16 %v2256
        %v2307 = vunpack.c.l.b16 %v2257
        %v2308 = vpack.c.b16 %v2293, %v2292
        %v2309 = vpack.c.b16 %v2295, %v2294
        %v2310 = vpack.c.b16 %v2297, %v2296
        %v2311 = vpack.c.b16 %v2299, %v2298
        %v2312 = vpack.c.b16 %v2301, %v2300
        %v2313 = vpack.c.b16 %v2303, %v2302
        %v2314 = vpack.c.b16 %v2305, %v2304
        %v2315 = vpack.c.b16 %v2307, %v2306
        %2324 = vmatprep.subr.bf16.mxu0 0
        %2325 = vmatpush1.bf16.msra.mxu0 %v2308
        %2326 = vmatprep.subr.bf16.mxu0 0
        %2327 = vmatpush1.bf16.msra.mxu0 %v2309
        %2328 = vmatprep.subr.bf16.mxu0 0
        %2329 = vmatpush1.bf16.msra.mxu0 %v2310
        %2330 = vmatprep.subr.bf16.mxu0 0
        %2331 = vmatpush1.bf16.msra.mxu0 %v2311
        %2332 = vmatprep.subr.bf16.mxu0 0
        %2333 = vmatpush1.bf16.msra.mxu0 %v2312
        %2334 = vmatprep.subr.bf16.mxu0 0
        %2335 = vmatpush1.bf16.msra.mxu0 %v2313
        %2336 = vmatprep.subr.bf16.mxu0 0
        %2337 = vmatpush1.bf16.msra.mxu0 %v2314
        %2338 = vmatprep.subr.bf16.mxu0 0
        %2339 = vmatpush1.bf16.msra.mxu0 %v2315
        %2340 = vmatprep.subr.bf16.mxu0 0
        %2341 = vmatpush1.bf16.msra.mxu0 0
        %2342 = vmatprep.subr.bf16.mxu0 0
        %2343 = vmatpush1.bf16.msra.mxu0 0
        %2344 = vmatprep.subr.bf16.mxu0 0
        %2345 = vmatpush1.bf16.msra.mxu0 0
        %2346 = vmatprep.subr.bf16.mxu0 0
        %2347 = vmatpush1.bf16.msra.mxu0 0
        %2348 = vmatprep.subr.bf16.mxu0 0
        %2349 = vmatpush1.bf16.msra.mxu0 0
        %2350 = vmatprep.subr.bf16.mxu0 0
        %2351 = vmatpush1.bf16.msra.mxu0 0
        %2352 = vmatprep.subr.bf16.mxu0 0
        %2353 = vmatpush1.bf16.msra.mxu0 0
        %2354 = vmatprep.subr.bf16.mxu0 0
        %2355 = vmatpush1.bf16.msra.mxu0 0
        %2356 = vmatprep.mubr.bf16.mxu0 0
        %2357 = vmatmul.mubr.bf16.gmra.mrb[0].mxu0 %v2274
        %v2358 = vpop.f32.mrb[0].mxu0
        %v2359 = vadd.f32 0.0, %v2358
        %v2360 = vpop.f32.mrb[0].mxu0
        %v2361 = vpop.f32.mrb[0].mxu0
        %v2362 = vadd.f32 0.0, %v2361
        %v2363 = vpop.f32.mrb[0].mxu0
        %2364 = vdwg.mxu0
        %v2365 = vadd.f32 %v2234, %v2359
        %v2366 = vadd.f32 %v2237, %v2362
        %v2367 = vld [vmem:[%s7] sm:$0x1]
        %v2369 = vlaneseq
        %v2370 = vshrl.u32 %v2369, 7
        %v2371 = vsub.s32 0, %v2370
        %v2372 = vrot.slane %v2367, %v2371
        %v2374 = vadd.f32 %v2365, %v2372
        %v2375 = vadd.f32 %v2366, %v2372
        %v2376 = vadd.f32 %v2374, %v520
        %v2377 = vadd.f32 %v2375, %v523
        %v2378 = vmax.f32 %v2376, 0.0
        %v2379 = vmax.f32 %v2377, 0.0
        %2380 = vxpose.xlu0.b32.start [1/16] %v2378, 128
        %2381 = vxpose.xlu0.b32.cont [2/16] %v2379, 128
        %2382 = vxpose.xlu0.b32.cont [3/16] 0.0, 128
        %2383 = vxpose.xlu0.b32.cont [4/16] 0.0, 128
        %2384 = vxpose.xlu0.b32.cont [5/16] 0.0, 128
        %2385 = vxpose.xlu0.b32.cont [6/16] 0.0, 128
        %2386 = vxpose.xlu0.b32.cont [7/16] 0.0, 128
        %2387 = vxpose.xlu0.b32.cont [8/16] 0.0, 128
        %2388 = vxpose.xlu0.b32.cont [9/16] 0.0, 128
        %2389 = vxpose.xlu0.b32.cont [10/16] 0.0, 128
        %2390 = vxpose.xlu0.b32.cont [11/16] 0.0, 128
        %2391 = vxpose.xlu0.b32.cont [12/16] 0.0, 128
        %2392 = vxpose.xlu0.b32.cont [13/16] 0.0, 128
        %2393 = vxpose.xlu0.b32.cont [14/16] 0.0, 128
        %2394 = vxpose.xlu0.b32.cont [15/16] 0.0, 128
        %2395 = vxpose.xlu0.b32.end [16/16] 0.0, 128
        %v2396 = vpop.trf.xlu0
        %v2397 = vpop.trf.xlu0
        %v2398 = vpop.trf.xlu0
        %v2399 = vpop.trf.xlu0
        %v2400 = vpop.trf.xlu0
        %v2401 = vpop.trf.xlu0
        %v2402 = vpop.trf.xlu0
        %v2403 = vpop.trf.xlu0
        %v2404 = vpop.trf.xlu0
        %v2405 = vpop.trf.xlu0
        %v2406 = vpop.trf.xlu0
        %v2407 = vpop.trf.xlu0
        %v2408 = vpop.trf.xlu0
        %v2409 = vpop.trf.xlu0
        %v2410 = vpop.trf.xlu0
        %v2411 = vpop.trf.xlu0
        %vm2412 = vcmask 130048
        %2413 = vst.msk [vmem:[%s384] sm:$0xff] %vm2412, %v2396
        %s2414 = sand.u32 %s228, 1
        %s2415 = scalar_lea.sflag [#allocation5], %s2414
        %s2416 = sand.u32 %s228, 1
        %s2417 = smul.addr %s2416, 8
        %s2418 = scalar_lea.vmem [#allocation11], %s2417
        // Predicated region
        $region73: #{tpu_custom_call.1} parent=55 // pred_check
          %p2419 = pneg %p238
        $region74: #{tpu_custom_call.1} parent=55 // pred_check_branch
          %2421 = sbr.rel (%p2419) target = $region76
        $region75: #{tpu_custom_call.1} parent=55 // pred_region
          %s2423 = ssub.s32 128, 128
          %2424 = vsyncadd %s2415, %s2423
          %s2425 = smul.addr %s26, 128
          %s2426 = scalar_lea.hbm %s9, %s2425
          %s2428 = sshll.u32 %s2418, 4
          %s2429 = int_to_ptr.vmem [resolvable:$true] %s2428
          %2431 = dma.vmem_to_hbm [thread:$0]  %s2429, 128, %s2426, %s2415
        $region76: #{tpu_custom_call.1} parent=55 // pred_fallthru
          _
      $region56: #{tpu_custom_call.1} parent=5 // pred_fallthru
        _
      %p2432 = scmp.le.s32.totalorder 2, %s21
      // Predicated region
      $region77: #{tpu_custom_call.1} parent=5 // pred_check
        %p2433 = pneg %p2432
      $region78: #{tpu_custom_call.1} parent=5 // pred_check_branch
        %2435 = sbr.rel (%p2433) target = $region80
      $region79: #{tpu_custom_call.1} parent=5 // pred_region
        %s2436 = ssub.s32 %s21, 2
        // Predicated region
        $region81: #{tpu_custom_call.1} parent=79 // pred_check
          %p2437 = pneg %p244
        $region82: #{tpu_custom_call.1} parent=79 // pred_check_branch
          %2439 = sbr.rel (%p2437) target = $region84
        $region83: #{tpu_custom_call.1} parent=79 // pred_region
          %s2440 = sand.u32 %s229, 1
          %s2441 = scalar_lea.sflag [#allocation5], %s2440
          %s2442 = sand.u32 %s229, 1
          %s2443 = smul.addr %s2442, 8
          %s2444 = scalar_lea.vmem [#allocation11], %s2443
          %2445 = dma.done %s2441, 128
        $region84: #{tpu_custom_call.1} parent=79 // pred_fallthru
          _
      $region80: #{tpu_custom_call.1} parent=5 // pred_fallthru
        _
    $region6: #{tpu_custom_call.1} parent=1 // loop_footer
      %s25 = sadd.s32 1, %s21
    $region7: #{tpu_custom_call.1} parent=1 // loop_footer_branch
      %20 = sbr.rel target = $region3
    $region8: #{tpu_custom_call.1} parent=1 // loop_exit
      _
    %2446 = vsyncpa [#allocation4], 1
    %s2447 = scalar_lea.sflag [#allocation4], 1
    %2448 = vsyncpa %s2447, 1
    %2449 = vsyncpa [#allocation7], 1
    %2450 = vsyncpa [#allocation10], 1
    %2451 = vsyncpa [#allocation5], 1
    %s2452 = scalar_lea.sflag [#allocation5], 1
    %2453 = vsyncpa %s2452, 1

</llo_original>
